<compile_context>
chip_gen: v5e
topology: v5e:2x2
jax: 0.10.0
libtpu: 0.0.40
codegen_flags: <defaults>
</compile_context>

<pallas_src>
import math

import jax
import jax.numpy as jnp
import numpy as np
from jax.experimental import pallas as pl
from jax.experimental.pallas import tpu as pltpu


def _round_up(n: int, m: int) -> int:
    return ((n + m - 1) // m) * m


def _const_spec(shape, single_buffer: bool):
    """BlockSpec for a grid-invariant input; single-buffered when supported."""
    ndim = len(shape)
    idx = lambda b: (0,) * ndim
    if single_buffer:
        try:
            return pl.BlockSpec(shape, idx, pipeline_mode=pl.Buffered(1))
        except TypeError:
            pass
    return pl.BlockSpec(shape, idx)


def _choose_nb(n: int, hw: int, c: int):
    """Batch block size: fill MXU rows while bounding kernel-intermediate VMEM."""
    L = hw + 1
    per_n = 10 * L * c * 4                 # rough bytes of live temps per batch row
    budget = 20 * 1024 * 1024              # conservative: leaves room in v7x 64 MiB VMEM
    nb_cap = max(8, (budget // max(per_n, 1)) // 8 * 8)
    if n <= 8:
        return n, n                        # one step; block == full array dim (legal tiling)
    # keep >= 2 grid steps so v7x's two TensorCores both get work
    half = _round_up((n + 1) // 2, 8)
    nb = min(nb_cap, half)
    n_pad = _round_up(n, nb)
    return nb, n_pad


def _vmem_limit_bytes(nb: int, hw: int, c: int, o_pad: int, num_heads: int) -> int:
    L = hw + 1
    weights = (3 * c * c + c * o_pad + 2 * c * num_heads) * 2       # bf16 weights + selectors
    weights += (hw + 1) * c * 4 + (3 * c + o_pad) * 4               # f32 pos + biases
    x_tile = nb * hw * c * 2                                        # bf16, double-buffered
    out_tile = nb * o_pad * 4                                       # f32, double-buffered
    scratch = 10 * nb * L * c * 4                                   # generous temp allowance
    need = weights + 2 * x_tile + 2 * out_tile + scratch + (4 << 20)
    try:
        phys = pltpu.get_tpu_info().vmem_capacity_bytes
    except Exception:
        phys = 64 * 1024 * 1024                                     # v7x per-core floor
    return int(min(max(need, 32 * 1024 * 1024), phys * 7 // 8))


def make_attnpool_kernel(num_heads: int, nb: int, hw: int, c: int):
    """Fused AttentionPool2d hot path for a block of `nb` batch elements."""
    bf16 = jnp.bfloat16

    def kernel(x_ref, pos0_ref, posb_ref, wq_ref, bq_ref, wk_ref, bk_ref,
               wv_ref, bv_ref, wc_ref, bc_ref, hsel_ref, hselT_ref, o_ref):
        x3 = x_ref[...]                                             # (nb, hw, C) bf16

        # ---- token construction fused in VMEM (no HBM `tokens` round trip) --
        x_mean = jnp.mean(x3.astype(jnp.float32), axis=1)           # (nb, C) f32
        cls_tok = (x_mean + pos0_ref[...]).astype(bf16)             # (nb, C) bf16
        body_tok = (x3 + posb_ref[...][None, :, :]).astype(bf16).reshape(nb * hw, c)

        # ---- q/k/v projections: bf16 MXU inputs, f32 accumulation -----------
        q = jnp.dot(cls_tok, wq_ref[...],
                    preferred_element_type=jnp.float32) + bq_ref[...]        # (nb, C) f32
        k_cls = jnp.dot(cls_tok, wk_ref[...],
                        preferred_element_type=jnp.float32) + bk_ref[...]    # (nb, C) f32
        v_cls = jnp.dot(cls_tok, wv_ref[...],
                        preferred_element_type=jnp.float32) + bv_ref[...]    # (nb, C) f32
        k_body = (jnp.dot(body_tok, wk_ref[...],
                          preferred_element_type=jnp.float32)
                  + bk_ref[...]).astype(bf16)                                # (nb*hw, C) bf16
        v_body = (jnp.dot(body_tok, wv_ref[...],
                          preferred_element_type=jnp.float32)
                  + bv_ref[...]).astype(bf16)                                # (nb*hw, C) bf16

        # ---- all-head scores via constant 0/1 head selector (no head loop) --
        hsel = hsel_ref[...]                                        # (C, H) bf16
        hselT = hselT_ref[...]                                      # (H, C) bf16
        s_cls = jnp.dot((q * k_cls).astype(bf16), hsel,
                        preferred_element_type=jnp.float32)                  # (nb, H)
        qb = q.astype(bf16)
        kq = k_body.reshape(nb, hw, c) * qb[:, None, :]                      # (nb, hw, C) bf16
        s_body = jnp.dot(kq.reshape(nb * hw, c), hsel,
                         preferred_element_type=jnp.float32)                 # (nb*hw, H)
        s_body3 = s_body.reshape(nb, hw, num_heads)                          # (nb, hw, H) f32

        # ---- fused softmax over the L = hw + 1 keys, all heads, f32 stats ---
        m = jnp.maximum(jnp.max(s_body3, axis=1), s_cls)                     # (nb, H)
        e_cls = jnp.exp(s_cls - m)                                           # (nb, H)
        e_body = jnp.exp(s_body3 - m[:, None, :])                            # (nb, hw, H)
        denom = e_cls + jnp.sum(e_body, axis=1)                              # (nb, H)
        inv = 1.0 / denom                                                    # exact; off MXU path
        p_cls = e_cls * inv                                                  # (nb, H) f32
        p_body = (e_body * inv[:, None, :]).astype(bf16)                     # (nb, hw, H) bf16

        # ---- weighted sum over keys for all heads at once --------------------
        p_exp = jnp.dot(p_body.reshape(nb * hw, num_heads), hselT,
                        preferred_element_type=jnp.float32).astype(bf16)     # (nb*hw, C) bf16
        pv = (p_exp * v_body).reshape(nb, hw, c)                             # bf16
        acc_body = jnp.sum(pv, axis=1, dtype=jnp.float32)                    # (nb, C) f32
        acc_cls = jnp.dot(p_cls.astype(bf16), hselT,
                          preferred_element_type=jnp.float32) * v_cls        # (nb, C) f32
        attn = (acc_body + acc_cls).astype(bf16)                             # (nb, C) bf16

        # ---- output projection; lane-dense store (O padded to 128) ----------
        out = jnp.dot(attn, wc_ref[...],
                      preferred_element_type=jnp.float32) + bc_ref[...]      # (nb, O_pad) f32
        o_ref[...] = out.astype(o_ref.dtype)

    return kernel


def attention_pool2d(x_nchw, params, num_heads):
    """Forward pass equivalent to open_clip AttentionPool2d.forward."""
    N, C, H, W = x_nchw.shape
    HW = H * W
    O = params["wc"].shape[0]
    assert C % num_heads == 0, "embed_dim must be divisible by num_heads"
    head_dim = C // num_heads
    scale = float(head_dim) ** -0.5

    nb, n_pad = _choose_nb(N, HW, C)
    O_pad = _round_up(max(O, 128), 128)           # lane-dense output tile

    # bf16 transpose NCHW -> (N, HW, C): halves the pre-kernel HBM traffic.
    x_t = x_nchw.astype(jnp.bfloat16).reshape(N, C, HW).transpose(0, 2, 1)
    if n_pad != N:
        x_t = jnp.pad(x_t, ((0, n_pad - N), (0, 0), (0, 0)))

    pos = params["pos"].astype(jnp.float32)
    pos0 = pos[0:1]                               # (1, C)  CLS positional embedding (f32)
    posb = pos[1:]                                # (HW, C) body positional embeddings (f32)

    # Fold the attention scale into wq/bq in f32, then cast weights to bf16.
    wq_t = (params["wq"].T.astype(jnp.float32) * scale).astype(jnp.bfloat16)
    bq_s = (params["bq"].astype(jnp.float32) * scale).reshape(1, C)
    wk_t = params["wk"].T.astype(jnp.bfloat16)
    bk = params["bk"].astype(jnp.float32).reshape(1, C)
    wv_t = params["wv"].T.astype(jnp.bfloat16)
    bv = params["bv"].astype(jnp.float32).reshape(1, C)
    wc_t = jnp.zeros((C, O_pad), jnp.bfloat16).at[:, :O].set(
        params["wc"].T.astype(jnp.bfloat16))
    bc = jnp.zeros((1, O_pad), jnp.float32).at[:, :O].set(
        params["bc"].astype(jnp.float32))

    # Constant 0/1 head selector (C, H) and its transpose (H, C) — exact in bf16.
    head_ids = jnp.arange(C, dtype=jnp.int32) // head_dim
    hsel = (head_ids[:, None] ==
            jnp.arange(num_heads, dtype=jnp.int32)[None, :]).astype(jnp.bfloat16)
    hselT = hsel.T

    kernel = make_attnpool_kernel(num_heads, nb, HW, C)

    L = HW + 1
    cost = pl.CostEstimate(
        flops=int(2 * n_pad * (2 * HW + 3) * C * C          # q/k/v projections
                  + 4 * n_pad * L * C * num_heads           # score + prob-expand matmuls
                  + 2 * n_pad * C * O_pad                   # output projection
                  + 8 * n_pad * L * C),                     # vector work (adds/softmax/sums)
        transcendentals=int(n_pad * L * num_heads),
        bytes_accessed=int(x_t.size * 2
                           + (3 * C * C + C * O_pad + 2 * C * num_heads) * 2
                           + (L * C + 3 * C + O_pad) * 4
                           + n_pad * O_pad * 4),
    )
    vmem_limit = _vmem_limit_bytes(nb, HW, C, O_pad, num_heads)

    def run(single_buffer: bool):
        cspec = lambda shape: _const_spec(shape, single_buffer)
        return pl.pallas_call(
            kernel,
            out_shape=jax.ShapeDtypeStruct((n_pad, O_pad), jnp.float32),
            grid=(n_pad // nb,),
            in_specs=[
                pl.BlockSpec((nb, HW, C), lambda b: (b, 0, 0)),   # x (per-step tile)
                cspec((1, C)),                                    # pos[0]
                cspec((HW, C)),                                   # pos[1:]
                cspec((C, C)),                                    # wq (scaled, bf16)
                cspec((1, C)),                                    # bq (scaled, f32)
                cspec((C, C)),                                    # wk
                cspec((1, C)),                                    # bk
                cspec((C, C)),                                    # wv
                cspec((1, C)),                                    # bv
                cspec((C, O_pad)),                                # wc (padded)
                cspec((1, O_pad)),                                # bc (padded)
                cspec((C, num_heads)),                            # head selector
                cspec((num_heads, C)),                            # head selector^T
            ],
            out_specs=pl.BlockSpec((nb, O_pad), lambda b: (b, 0)),
            compiler_params=pltpu.CompilerParams(
                dimension_semantics=("parallel",),
                vmem_limit_bytes=vmem_limit),
            cost_estimate=cost,
        )(x_t, pos0, posb, wq_t, bq_s, wk_t, bk, wv_t, bv, wc_t, bc, hsel, hselT)

    try:
        out = jax.block_until_ready(run(True))
    except Exception:
        # Fallback if this JAX build rejects pl.Buffered(1) single-buffering.
        out = jax.block_until_ready(run(False))

    return out[:N, :O]


def reference(x_nchw, p, num_heads):
    """Pure-JAX (f32) mirror of the F.multi_head_attention_forward path."""
    N, C, H, W = x_nchw.shape
    t = x_nchw.reshape(N, C, H * W).transpose(2, 0, 1)
    t = jnp.concatenate([t.mean(axis=0, keepdims=True), t], 0)
    t = t + p["pos"][:, None, :]
    L = t.shape[0]
    dh = C // num_heads
    q = t @ p["wq"].T + p["bq"]
    k = t @ p["wk"].T + p["bk"]
    v = t @ p["wv"].T + p["bv"]
    q = q * (dh ** -0.5)

    def split(a):
        return a.reshape(L, N, num_heads, dh).transpose(1, 2, 0, 3)

    qh, kh, vh = split(q), split(k), split(v)
    s = jnp.einsum("nhqd,nhkd->nhqk", qh, kh)
    attn = jax.nn.softmax(s, axis=-1)
    o = jnp.einsum("nhqk,nhkd->nhqd", attn, vh)
    o = o.transpose(2, 0, 1, 3).reshape(L, N, C)
    out = o @ p["wc"].T + p["bc"]
    return out[0]


if __name__ == "__main__":
    spacial_dim = 4
    embed_dim = 32
    num_heads = 4
    output_dim = 16
    batch = 2

    key = jax.random.PRNGKey(0)
    keys = jax.random.split(key, 11)

    L = spacial_dim ** 2 + 1
    params = {
        "pos": jax.random.normal(keys[0], (L, embed_dim), jnp.float32)
               / math.sqrt(embed_dim),
        "wq": jax.random.normal(keys[1], (embed_dim, embed_dim), jnp.float32) * 0.1,
        "bq": jax.random.normal(keys[2], (embed_dim,), jnp.float32) * 0.1,
        "wk": jax.random.normal(keys[3], (embed_dim, embed_dim), jnp.float32) * 0.1,
        "bk": jax.random.normal(keys[4], (embed_dim,), jnp.float32) * 0.1,
        "wv": jax.random.normal(keys[5], (embed_dim, embed_dim), jnp.float32) * 0.1,
        "bv": jax.random.normal(keys[6], (embed_dim,), jnp.float32) * 0.1,
        "wc": jax.random.normal(keys[7], (output_dim, embed_dim), jnp.float32) * 0.1,
        "bc": jax.random.normal(keys[8], (output_dim,), jnp.float32) * 0.1,
    }

    x = jax.random.normal(keys[9], (batch, embed_dim, spacial_dim, spacial_dim),
                          jnp.float32)

    out = attention_pool2d(x, params, num_heads)
    out = jax.block_until_ready(out)

    ref = jax.block_until_ready(reference(x, params, num_heads))
    # Tolerance accounts for bf16 MXU inputs (reference path is full f32).
    np.testing.assert_allclose(np.asarray(out), np.asarray(ref),
                               rtol=1e-2, atol=1e-2)
    print("KERNEL_OK")
</pallas_src>

<mosaic_0001>
module attributes {stable_mosaic.version = 11 : i64} {
  func.func @kernel(%arg0: i32, %arg1: memref<2x16x32xbf16, #tpu.memory_space<vmem>>, %arg2: memref<1x32xf32, #tpu.memory_space<vmem>>, %arg3: memref<16x32xf32, #tpu.memory_space<vmem>>, %arg4: memref<32x32xbf16, #tpu.memory_space<vmem>>, %arg5: memref<1x32xf32, #tpu.memory_space<vmem>>, %arg6: memref<32x32xbf16, #tpu.memory_space<vmem>>, %arg7: memref<1x32xf32, #tpu.memory_space<vmem>>, %arg8: memref<32x32xbf16, #tpu.memory_space<vmem>>, %arg9: memref<1x32xf32, #tpu.memory_space<vmem>>, %arg10: memref<32x128xbf16, #tpu.memory_space<vmem>>, %arg11: memref<1x128xf32, #tpu.memory_space<vmem>>, %arg12: memref<32x4xbf16, #tpu.memory_space<vmem>>, %arg13: memref<4x32xbf16, #tpu.memory_space<vmem>>, %arg14: memref<2x128xf32, #tpu.memory_space<vmem>>) attributes {dimension_semantics = [#tpu.dimension_semantics<parallel>], iteration_bounds = array<i64: 1>, scalar_prefetch = 0 : i64, scratch_operands = 0 : i64, tpu.core_type = #tpu.core_type<tc>, window_params = [{transform_indices = @transform_0, window_bounds = array<i64: 2, 16, 32>}, {pipeline_mode = #tpu.pipeline_mode<synchronous>, transform_indices = @transform_1, window_bounds = array<i64: 1, 32>}, {pipeline_mode = #tpu.pipeline_mode<synchronous>, transform_indices = @transform_2, window_bounds = array<i64: 16, 32>}, {pipeline_mode = #tpu.pipeline_mode<synchronous>, transform_indices = @transform_3, window_bounds = array<i64: 32, 32>}, {pipeline_mode = #tpu.pipeline_mode<synchronous>, transform_indices = @transform_4, window_bounds = array<i64: 1, 32>}, {pipeline_mode = #tpu.pipeline_mode<synchronous>, transform_indices = @transform_5, window_bounds = array<i64: 32, 32>}, {pipeline_mode = #tpu.pipeline_mode<synchronous>, transform_indices = @transform_6, window_bounds = array<i64: 1, 32>}, {pipeline_mode = #tpu.pipeline_mode<synchronous>, transform_indices = @transform_7, window_bounds = array<i64: 32, 32>}, {pipeline_mode = #tpu.pipeline_mode<synchronous>, transform_indices = @transform_8, window_bounds = array<i64: 1, 32>}, {pipeline_mode = #tpu.pipeline_mode<synchronous>, transform_indices = @transform_9, window_bounds = array<i64: 32, 128>}, {pipeline_mode = #tpu.pipeline_mode<synchronous>, transform_indices = @transform_10, window_bounds = array<i64: 1, 128>}, {pipeline_mode = #tpu.pipeline_mode<synchronous>, transform_indices = @transform_11, window_bounds = array<i64: 32, 4>}, {pipeline_mode = #tpu.pipeline_mode<synchronous>, transform_indices = @transform_12, window_bounds = array<i64: 4, 32>}, {transform_indices = @transform_13, window_bounds = array<i64: 2, 128>}]} {
    %c0 = arith.constant 0 : index
    %c0_0 = arith.constant 0 : index
    %c0_1 = arith.constant 0 : index
    %0 = vector.load %arg1[%c0, %c0_0, %c0_1] : memref<2x16x32xbf16, #tpu.memory_space<vmem>>, vector<2x16x32xbf16>
    %1 = arith.extf %0 : vector<2x16x32xbf16> to vector<2x16x32xf32>
    %cst = arith.constant dense<0.000000e+00> : vector<2x32xf32>
    %2 = vector.multi_reduction <add>, %1, %cst [1] : vector<2x16x32xf32> to vector<2x32xf32>
    %cst_2 = arith.constant 1.600000e+01 : f32
    %3 = vector.broadcast %cst_2 : f32 to vector<2x32xf32>
    %4 = arith.divf %2, %3 : vector<2x32xf32>
    %c0_3 = arith.constant 0 : index
    %c0_4 = arith.constant 0 : index
    %5 = vector.load %arg2[%c0_3, %c0_4] : memref<1x32xf32, #tpu.memory_space<vmem>>, vector<1x32xf32>
    %6 = vector.broadcast %5 : vector<1x32xf32> to vector<2x32xf32>
    %7 = arith.addf %4, %6 : vector<2x32xf32>
    %8 = arith.truncf %7 : vector<2x32xf32> to vector<2x32xbf16>
    %c0_5 = arith.constant 0 : index
    %c0_6 = arith.constant 0 : index
    %9 = vector.load %arg3[%c0_5, %c0_6] : memref<16x32xf32, #tpu.memory_space<vmem>>, vector<16x32xf32>
    %10 = vector.shape_cast %9 : vector<16x32xf32> to vector<1x16x32xf32>
    %11 = arith.extf %0 : vector<2x16x32xbf16> to vector<2x16x32xf32>
    %12 = vector.broadcast %10 : vector<1x16x32xf32> to vector<2x16x32xf32>
    %13 = arith.addf %11, %12 : vector<2x16x32xf32>
    %14 = arith.truncf %13 : vector<2x16x32xf32> to vector<2x16x32xbf16>
    %15 = vector.shape_cast %14 : vector<2x16x32xbf16> to vector<32x32xbf16>
    %c0_7 = arith.constant 0 : index
    %c0_8 = arith.constant 0 : index
    %16 = vector.load %arg4[%c0_7, %c0_8] : memref<32x32xbf16, #tpu.memory_space<vmem>>, vector<32x32xbf16>
    %cst_9 = arith.constant dense<0.000000e+00> : vector<2x32xf32>
    %17 = tpu.matmul %8, %16, %cst_9 {dimension_numbers = #tpu.dot_dimension_numbers<[1], [0], [0], [1], [0, 0, 1, 1], [], []>} : vector<2x32xbf16>, vector<32x32xbf16>, vector<2x32xf32> -> vector<2x32xf32>
    %c0_10 = arith.constant 0 : index
    %c0_11 = arith.constant 0 : index
    %18 = vector.load %arg5[%c0_10, %c0_11] : memref<1x32xf32, #tpu.memory_space<vmem>>, vector<1x32xf32>
    %19 = vector.broadcast %18 : vector<1x32xf32> to vector<2x32xf32>
    %20 = arith.addf %17, %19 : vector<2x32xf32>
    %c0_12 = arith.constant 0 : index
    %c0_13 = arith.constant 0 : index
    %21 = vector.load %arg6[%c0_12, %c0_13] : memref<32x32xbf16, #tpu.memory_space<vmem>>, vector<32x32xbf16>
    %cst_14 = arith.constant dense<0.000000e+00> : vector<2x32xf32>
    %22 = tpu.matmul %8, %21, %cst_14 {dimension_numbers = #tpu.dot_dimension_numbers<[1], [0], [0], [1], [0, 0, 1, 1], [], []>} : vector<2x32xbf16>, vector<32x32xbf16>, vector<2x32xf32> -> vector<2x32xf32>
    %c0_15 = arith.constant 0 : index
    %c0_16 = arith.constant 0 : index
    %23 = vector.load %arg7[%c0_15, %c0_16] : memref<1x32xf32, #tpu.memory_space<vmem>>, vector<1x32xf32>
    %24 = vector.broadcast %23 : vector<1x32xf32> to vector<2x32xf32>
    %25 = arith.addf %22, %24 : vector<2x32xf32>
    %c0_17 = arith.constant 0 : index
    %c0_18 = arith.constant 0 : index
    %26 = vector.load %arg8[%c0_17, %c0_18] : memref<32x32xbf16, #tpu.memory_space<vmem>>, vector<32x32xbf16>
    %cst_19 = arith.constant dense<0.000000e+00> : vector<2x32xf32>
    %27 = tpu.matmul %8, %26, %cst_19 {dimension_numbers = #tpu.dot_dimension_numbers<[1], [0], [0], [1], [0, 0, 1, 1], [], []>} : vector<2x32xbf16>, vector<32x32xbf16>, vector<2x32xf32> -> vector<2x32xf32>
    %c0_20 = arith.constant 0 : index
    %c0_21 = arith.constant 0 : index
    %28 = vector.load %arg9[%c0_20, %c0_21] : memref<1x32xf32, #tpu.memory_space<vmem>>, vector<1x32xf32>
    %29 = vector.broadcast %28 : vector<1x32xf32> to vector<2x32xf32>
    %30 = arith.addf %27, %29 : vector<2x32xf32>
    %c0_22 = arith.constant 0 : index
    %c0_23 = arith.constant 0 : index
    %31 = vector.load %arg6[%c0_22, %c0_23] : memref<32x32xbf16, #tpu.memory_space<vmem>>, vector<32x32xbf16>
    %cst_24 = arith.constant dense<0.000000e+00> : vector<32x32xf32>
    %32 = tpu.matmul %15, %31, %cst_24 {dimension_numbers = #tpu.dot_dimension_numbers<[1], [0], [0], [1], [0, 0, 1, 1], [], []>} : vector<32x32xbf16>, vector<32x32xbf16>, vector<32x32xf32> -> vector<32x32xf32>
    %c0_25 = arith.constant 0 : index
    %c0_26 = arith.constant 0 : index
    %33 = vector.load %arg7[%c0_25, %c0_26] : memref<1x32xf32, #tpu.memory_space<vmem>>, vector<1x32xf32>
    %34 = vector.broadcast %33 : vector<1x32xf32> to vector<32x32xf32>
    %35 = arith.addf %32, %34 : vector<32x32xf32>
    %36 = arith.truncf %35 : vector<32x32xf32> to vector<32x32xbf16>
    %c0_27 = arith.constant 0 : index
    %c0_28 = arith.constant 0 : index
    %37 = vector.load %arg8[%c0_27, %c0_28] : memref<32x32xbf16, #tpu.memory_space<vmem>>, vector<32x32xbf16>
    %cst_29 = arith.constant dense<0.000000e+00> : vector<32x32xf32>
    %38 = tpu.matmul %15, %37, %cst_29 {dimension_numbers = #tpu.dot_dimension_numbers<[1], [0], [0], [1], [0, 0, 1, 1], [], []>} : vector<32x32xbf16>, vector<32x32xbf16>, vector<32x32xf32> -> vector<32x32xf32>
    %c0_30 = arith.constant 0 : index
    %c0_31 = arith.constant 0 : index
    %39 = vector.load %arg9[%c0_30, %c0_31] : memref<1x32xf32, #tpu.memory_space<vmem>>, vector<1x32xf32>
    %40 = vector.broadcast %39 : vector<1x32xf32> to vector<32x32xf32>
    %41 = arith.addf %38, %40 : vector<32x32xf32>
    %42 = arith.truncf %41 : vector<32x32xf32> to vector<32x32xbf16>
    %c0_32 = arith.constant 0 : index
    %c0_33 = arith.constant 0 : index
    %43 = vector.load %arg12[%c0_32, %c0_33] : memref<32x4xbf16, #tpu.memory_space<vmem>>, vector<32x4xbf16>
    %c0_34 = arith.constant 0 : index
    %c0_35 = arith.constant 0 : index
    %44 = vector.load %arg13[%c0_34, %c0_35] : memref<4x32xbf16, #tpu.memory_space<vmem>>, vector<4x32xbf16>
    %45 = arith.mulf %20, %25 : vector<2x32xf32>
    %46 = arith.truncf %45 : vector<2x32xf32> to vector<2x32xbf16>
    %cst_36 = arith.constant dense<0.000000e+00> : vector<2x4xf32>
    %47 = tpu.matmul %46, %43, %cst_36 {dimension_numbers = #tpu.dot_dimension_numbers<[1], [0], [0], [1], [0, 0, 1, 1], [], []>} : vector<2x32xbf16>, vector<32x4xbf16>, vector<2x4xf32> -> vector<2x4xf32>
    %48 = arith.truncf %20 : vector<2x32xf32> to vector<2x32xbf16>
    %49 = vector.shape_cast %36 : vector<32x32xbf16> to vector<2x16x32xbf16>
    %50 = vector.shape_cast %48 : vector<2x32xbf16> to vector<2x1x32xbf16>
    %51 = vector.broadcast %50 : vector<2x1x32xbf16> to vector<2x16x32xbf16>
    %52 = arith.mulf %49, %51 : vector<2x16x32xbf16>
    %53 = vector.shape_cast %52 : vector<2x16x32xbf16> to vector<32x32xbf16>
    %cst_37 = arith.constant dense<0.000000e+00> : vector<32x4xf32>
    %54 = tpu.matmul %53, %43, %cst_37 {dimension_numbers = #tpu.dot_dimension_numbers<[1], [0], [0], [1], [0, 0, 1, 1], [], []>} : vector<32x32xbf16>, vector<32x4xbf16>, vector<32x4xf32> -> vector<32x4xf32>
    %55 = vector.shape_cast %54 : vector<32x4xf32> to vector<2x16x4xf32>
    %cst_38 = arith.constant dense<0xFF800000> : vector<2x4xf32>
    %56 = vector.multi_reduction <maximumf>, %55, %cst_38 [1] : vector<2x16x4xf32> to vector<2x4xf32>
    %57 = arith.maximumf %56, %47 : vector<2x4xf32>
    %58 = arith.subf %47, %57 : vector<2x4xf32>
    %59 = math.exp %58 : vector<2x4xf32>
    %60 = vector.shape_cast %57 : vector<2x4xf32> to vector<2x1x4xf32>
    %61 = vector.broadcast %60 : vector<2x1x4xf32> to vector<2x16x4xf32>
    %62 = arith.subf %55, %61 : vector<2x16x4xf32>
    %63 = math.exp %62 : vector<2x16x4xf32>
    %cst_39 = arith.constant dense<0.000000e+00> : vector<2x4xf32>
    %64 = vector.multi_reduction <add>, %63, %cst_39 [1] : vector<2x16x4xf32> to vector<2x4xf32>
    %65 = arith.addf %59, %64 : vector<2x4xf32>
    %cst_40 = arith.constant 1.000000e+00 : f32
    %66 = vector.broadcast %cst_40 : f32 to vector<2x4xf32>
    %67 = arith.divf %66, %65 : vector<2x4xf32>
    %68 = arith.mulf %59, %67 : vector<2x4xf32>
    %69 = vector.shape_cast %67 : vector<2x4xf32> to vector<2x1x4xf32>
    %70 = vector.broadcast %69 : vector<2x1x4xf32> to vector<2x16x4xf32>
    %71 = arith.mulf %63, %70 : vector<2x16x4xf32>
    %72 = arith.truncf %71 : vector<2x16x4xf32> to vector<2x16x4xbf16>
    %73 = vector.shape_cast %72 : vector<2x16x4xbf16> to vector<32x4xbf16>
    %cst_41 = arith.constant dense<0.000000e+00> : vector<32x32xf32>
    %74 = tpu.matmul %73, %44, %cst_41 {dimension_numbers = #tpu.dot_dimension_numbers<[1], [0], [0], [1], [0, 0, 1, 1], [], []>} : vector<32x4xbf16>, vector<4x32xbf16>, vector<32x32xf32> -> vector<32x32xf32>
    %75 = arith.truncf %74 : vector<32x32xf32> to vector<32x32xbf16>
    %76 = arith.mulf %75, %42 : vector<32x32xbf16>
    %77 = vector.shape_cast %76 : vector<32x32xbf16> to vector<2x16x32xbf16>
    %78 = arith.extf %77 : vector<2x16x32xbf16> to vector<2x16x32xf32>
    %cst_42 = arith.constant dense<0.000000e+00> : vector<2x32xf32>
    %79 = vector.multi_reduction <add>, %78, %cst_42 [1] : vector<2x16x32xf32> to vector<2x32xf32>
    %80 = arith.truncf %68 : vector<2x4xf32> to vector<2x4xbf16>
    %cst_43 = arith.constant dense<0.000000e+00> : vector<2x32xf32>
    %81 = tpu.matmul %80, %44, %cst_43 {dimension_numbers = #tpu.dot_dimension_numbers<[1], [0], [0], [1], [0, 0, 1, 1], [], []>} : vector<2x4xbf16>, vector<4x32xbf16>, vector<2x32xf32> -> vector<2x32xf32>
    %82 = arith.mulf %81, %30 : vector<2x32xf32>
    %83 = arith.addf %79, %82 : vector<2x32xf32>
    %84 = arith.truncf %83 : vector<2x32xf32> to vector<2x32xbf16>
    %c0_44 = arith.constant 0 : index
    %c0_45 = arith.constant 0 : index
    %85 = vector.load %arg10[%c0_44, %c0_45] : memref<32x128xbf16, #tpu.memory_space<vmem>>, vector<32x128xbf16>
    %cst_46 = arith.constant dense<0.000000e+00> : vector<2x128xf32>
    %86 = tpu.matmul %84, %85, %cst_46 {dimension_numbers = #tpu.dot_dimension_numbers<[1], [0], [0], [1], [0, 0, 1, 1], [], []>} : vector<2x32xbf16>, vector<32x128xbf16>, vector<2x128xf32> -> vector<2x128xf32>
    %c0_47 = arith.constant 0 : index
    %c0_48 = arith.constant 0 : index
    %87 = vector.load %arg11[%c0_47, %c0_48] : memref<1x128xf32, #tpu.memory_space<vmem>>, vector<1x128xf32>
    %88 = vector.broadcast %87 : vector<1x128xf32> to vector<2x128xf32>
    %89 = arith.addf %86, %88 : vector<2x128xf32>
    %c0_49 = arith.constant 0 : index
    %c0_50 = arith.constant 0 : index
    %90 = vector.load %arg14[%c0_49, %c0_50] : memref<2x128xf32, #tpu.memory_space<vmem>>, vector<2x128xf32>
    tpu.vector_store %arg14[%c0_49, %c0_50], %89 {strides = array<i32>} : memref<2x128xf32, #tpu.memory_space<vmem>>, vector<2x128xf32>,
    return
  }
  func.func @transform_0(%arg0: i32) -> (i32, i32, i32) {
    %c0_i32 = arith.constant 0 : i32
    %c0_i32_0 = arith.constant 0 : i32
    %c0_i32_1 = arith.constant 0 : i32
    return %arg0, %c0_i32, %c0_i32_0 : i32, i32, i32
  }
  func.func @transform_1(%arg0: i32) -> (i32, i32) {
    %c0_i32 = arith.constant 0 : i32
    %c0_i32_0 = arith.constant 0 : i32
    %c0_i32_1 = arith.constant 0 : i32
    return %c0_i32, %c0_i32_0 : i32, i32
  }
  func.func @transform_2(%arg0: i32) -> (i32, i32) {
    %c0_i32 = arith.constant 0 : i32
    %c0_i32_0 = arith.constant 0 : i32
    %c0_i32_1 = arith.constant 0 : i32
    return %c0_i32, %c0_i32_0 : i32, i32
  }
  func.func @transform_3(%arg0: i32) -> (i32, i32) {
    %c0_i32 = arith.constant 0 : i32
    %c0_i32_0 = arith.constant 0 : i32
    %c0_i32_1 = arith.constant 0 : i32
    return %c0_i32, %c0_i32_0 : i32, i32
  }
  func.func @transform_4(%arg0: i32) -> (i32, i32) {
    %c0_i32 = arith.constant 0 : i32
    %c0_i32_0 = arith.constant 0 : i32
    %c0_i32_1 = arith.constant 0 : i32
    return %c0_i32, %c0_i32_0 : i32, i32
  }
  func.func @transform_5(%arg0: i32) -> (i32, i32) {
    %c0_i32 = arith.constant 0 : i32
    %c0_i32_0 = arith.constant 0 : i32
    %c0_i32_1 = arith.constant 0 : i32
    return %c0_i32, %c0_i32_0 : i32, i32
  }
  func.func @transform_6(%arg0: i32) -> (i32, i32) {
    %c0_i32 = arith.constant 0 : i32
    %c0_i32_0 = arith.constant 0 : i32
    %c0_i32_1 = arith.constant 0 : i32
    return %c0_i32, %c0_i32_0 : i32, i32
  }
  func.func @transform_7(%arg0: i32) -> (i32, i32) {
    %c0_i32 = arith.constant 0 : i32
    %c0_i32_0 = arith.constant 0 : i32
    %c0_i32_1 = arith.constant 0 : i32
    return %c0_i32, %c0_i32_0 : i32, i32
  }
  func.func @transform_8(%arg0: i32) -> (i32, i32) {
    %c0_i32 = arith.constant 0 : i32
    %c0_i32_0 = arith.constant 0 : i32
    %c0_i32_1 = arith.constant 0 : i32
    return %c0_i32, %c0_i32_0 : i32, i32
  }
  func.func @transform_9(%arg0: i32) -> (i32, i32) {
    %c0_i32 = arith.constant 0 : i32
    %c0_i32_0 = arith.constant 0 : i32
    %c0_i32_1 = arith.constant 0 : i32
    return %c0_i32, %c0_i32_0 : i32, i32
  }
  func.func @transform_10(%arg0: i32) -> (i32, i32) {
    %c0_i32 = arith.constant 0 : i32
    %c0_i32_0 = arith.constant 0 : i32
    %c0_i32_1 = arith.constant 0 : i32
    return %c0_i32, %c0_i32_0 : i32, i32
  }
  func.func @transform_11(%arg0: i32) -> (i32, i32) {
    %c0_i32 = arith.constant 0 : i32
    %c0_i32_0 = arith.constant 0 : i32
    %c0_i32_1 = arith.constant 0 : i32
    return %c0_i32, %c0_i32_0 : i32, i32
  }
  func.func @transform_12(%arg0: i32) -> (i32, i32) {
    %c0_i32 = arith.constant 0 : i32
    %c0_i32_0 = arith.constant 0 : i32
    %c0_i32_1 = arith.constant 0 : i32
    return %c0_i32, %c0_i32_0 : i32, i32
  }
  func.func @transform_13(%arg0: i32) -> (i32, i32) {
    %c0_i32 = arith.constant 0 : i32
    %c0_i32_0 = arith.constant 0 : i32
    return %arg0, %c0_i32 : i32, i32
  }
}

module attributes {stable_mosaic.version = 11 : i64} {
  func.func @kernel(%arg0: i32, %arg1: memref<2x16x32xbf16, #tpu.memory_space<vmem>>, %arg2: memref<1x32xf32, #tpu.memory_space<vmem>>, %arg3: memref<16x32xf32, #tpu.memory_space<vmem>>, %arg4: memref<32x32xbf16, #tpu.memory_space<vmem>>, %arg5: memref<1x32xf32, #tpu.memory_space<vmem>>, %arg6: memref<32x32xbf16, #tpu.memory_space<vmem>>, %arg7: memref<1x32xf32, #tpu.memory_space<vmem>>, %arg8: memref<32x32xbf16, #tpu.memory_space<vmem>>, %arg9: memref<1x32xf32, #tpu.memory_space<vmem>>, %arg10: memref<32x128xbf16, #tpu.memory_space<vmem>>, %arg11: memref<1x128xf32, #tpu.memory_space<vmem>>, %arg12: memref<32x4xbf16, #tpu.memory_space<vmem>>, %arg13: memref<4x32xbf16, #tpu.memory_space<vmem>>, %arg14: memref<2x128xf32, #tpu.memory_space<vmem>>) attributes {dimension_semantics = [#tpu.dimension_semantics<parallel>], iteration_bounds = array<i64: 1>, scalar_prefetch = 0 : i64, scratch_operands = 0 : i64, tpu.core_type = #tpu.core_type<tc>, window_params = [{transform_indices = @transform_0, window_bounds = array<i64: 2, 16, 32>}, {pipeline_mode = #tpu.pipeline_mode<synchronous>, transform_indices = @transform_1, window_bounds = array<i64: 1, 32>}, {pipeline_mode = #tpu.pipeline_mode<synchronous>, transform_indices = @transform_2, window_bounds = array<i64: 16, 32>}, {pipeline_mode = #tpu.pipeline_mode<synchronous>, transform_indices = @transform_3, window_bounds = array<i64: 32, 32>}, {pipeline_mode = #tpu.pipeline_mode<synchronous>, transform_indices = @transform_4, window_bounds = array<i64: 1, 32>}, {pipeline_mode = #tpu.pipeline_mode<synchronous>, transform_indices = @transform_5, window_bounds = array<i64: 32, 32>}, {pipeline_mode = #tpu.pipeline_mode<synchronous>, transform_indices = @transform_6, window_bounds = array<i64: 1, 32>}, {pipeline_mode = #tpu.pipeline_mode<synchronous>, transform_indices = @transform_7, window_bounds = array<i64: 32, 32>}, {pipeline_mode = #tpu.pipeline_mode<synchronous>, transform_indices = @transform_8, window_bounds = array<i64: 1, 32>}, {pipeline_mode = #tpu.pipeline_mode<synchronous>, transform_indices = @transform_9, window_bounds = array<i64: 32, 128>}, {pipeline_mode = #tpu.pipeline_mode<synchronous>, transform_indices = @transform_10, window_bounds = array<i64: 1, 128>}, {pipeline_mode = #tpu.pipeline_mode<synchronous>, transform_indices = @transform_11, window_bounds = array<i64: 32, 4>}, {pipeline_mode = #tpu.pipeline_mode<synchronous>, transform_indices = @transform_12, window_bounds = array<i64: 4, 32>}, {transform_indices = @transform_13, window_bounds = array<i64: 2, 128>}]} {
    %c0 = arith.constant 0 : index
    %c0_0 = arith.constant 0 : index
    %c0_1 = arith.constant 0 : index
    %0 = vector.load %arg1[%c0, %c0_0, %c0_1] : memref<2x16x32xbf16, #tpu.memory_space<vmem>>, vector<2x16x32xbf16>
    %1 = arith.extf %0 : vector<2x16x32xbf16> to vector<2x16x32xf32>
    %cst = arith.constant dense<0.000000e+00> : vector<2x32xf32>
    %2 = vector.multi_reduction <add>, %1, %cst [1] : vector<2x16x32xf32> to vector<2x32xf32>
    %cst_2 = arith.constant 1.600000e+01 : f32
    %3 = vector.broadcast %cst_2 : f32 to vector<2x32xf32>
    %4 = arith.divf %2, %3 : vector<2x32xf32>
    %c0_3 = arith.constant 0 : index
    %c0_4 = arith.constant 0 : index
    %5 = vector.load %arg2[%c0_3, %c0_4] : memref<1x32xf32, #tpu.memory_space<vmem>>, vector<1x32xf32>
    %6 = vector.broadcast %5 : vector<1x32xf32> to vector<2x32xf32>
    %7 = arith.addf %4, %6 : vector<2x32xf32>
    %8 = arith.truncf %7 : vector<2x32xf32> to vector<2x32xbf16>
    %c0_5 = arith.constant 0 : index
    %c0_6 = arith.constant 0 : index
    %9 = vector.load %arg3[%c0_5, %c0_6] : memref<16x32xf32, #tpu.memory_space<vmem>>, vector<16x32xf32>
    %10 = vector.shape_cast %9 : vector<16x32xf32> to vector<1x16x32xf32>
    %11 = arith.extf %0 : vector<2x16x32xbf16> to vector<2x16x32xf32>
    %12 = vector.broadcast %10 : vector<1x16x32xf32> to vector<2x16x32xf32>
    %13 = arith.addf %11, %12 : vector<2x16x32xf32>
    %14 = arith.truncf %13 : vector<2x16x32xf32> to vector<2x16x32xbf16>
    %15 = vector.shape_cast %14 : vector<2x16x32xbf16> to vector<32x32xbf16>
    %c0_7 = arith.constant 0 : index
    %c0_8 = arith.constant 0 : index
    %16 = vector.load %arg4[%c0_7, %c0_8] : memref<32x32xbf16, #tpu.memory_space<vmem>>, vector<32x32xbf16>
    %cst_9 = arith.constant dense<0.000000e+00> : vector<2x32xf32>
    %17 = tpu.matmul %8, %16, %cst_9 {dimension_numbers = #tpu.dot_dimension_numbers<[1], [0], [0], [1], [0, 0, 1, 1], [], []>} : vector<2x32xbf16>, vector<32x32xbf16>, vector<2x32xf32> -> vector<2x32xf32>
    %c0_10 = arith.constant 0 : index
    %c0_11 = arith.constant 0 : index
    %18 = vector.load %arg5[%c0_10, %c0_11] : memref<1x32xf32, #tpu.memory_space<vmem>>, vector<1x32xf32>
    %19 = vector.broadcast %18 : vector<1x32xf32> to vector<2x32xf32>
    %20 = arith.addf %17, %19 : vector<2x32xf32>
    %c0_12 = arith.constant 0 : index
    %c0_13 = arith.constant 0 : index
    %21 = vector.load %arg6[%c0_12, %c0_13] : memref<32x32xbf16, #tpu.memory_space<vmem>>, vector<32x32xbf16>
    %cst_14 = arith.constant dense<0.000000e+00> : vector<2x32xf32>
    %22 = tpu.matmul %8, %21, %cst_14 {dimension_numbers = #tpu.dot_dimension_numbers<[1], [0], [0], [1], [0, 0, 1, 1], [], []>} : vector<2x32xbf16>, vector<32x32xbf16>, vector<2x32xf32> -> vector<2x32xf32>
    %c0_15 = arith.constant 0 : index
    %c0_16 = arith.constant 0 : index
    %23 = vector.load %arg7[%c0_15, %c0_16] : memref<1x32xf32, #tpu.memory_space<vmem>>, vector<1x32xf32>
    %24 = vector.broadcast %23 : vector<1x32xf32> to vector<2x32xf32>
    %25 = arith.addf %22, %24 : vector<2x32xf32>
    %c0_17 = arith.constant 0 : index
    %c0_18 = arith.constant 0 : index
    %26 = vector.load %arg8[%c0_17, %c0_18] : memref<32x32xbf16, #tpu.memory_space<vmem>>, vector<32x32xbf16>
    %cst_19 = arith.constant dense<0.000000e+00> : vector<2x32xf32>
    %27 = tpu.matmul %8, %26, %cst_19 {dimension_numbers = #tpu.dot_dimension_numbers<[1], [0], [0], [1], [0, 0, 1, 1], [], []>} : vector<2x32xbf16>, vector<32x32xbf16>, vector<2x32xf32> -> vector<2x32xf32>
    %c0_20 = arith.constant 0 : index
    %c0_21 = arith.constant 0 : index
    %28 = vector.load %arg9[%c0_20, %c0_21] : memref<1x32xf32, #tpu.memory_space<vmem>>, vector<1x32xf32>
    %29 = vector.broadcast %28 : vector<1x32xf32> to vector<2x32xf32>
    %30 = arith.addf %27, %29 : vector<2x32xf32>
    %c0_22 = arith.constant 0 : index
    %c0_23 = arith.constant 0 : index
    %31 = vector.load %arg6[%c0_22, %c0_23] : memref<32x32xbf16, #tpu.memory_space<vmem>>, vector<32x32xbf16>
    %cst_24 = arith.constant dense<0.000000e+00> : vector<32x32xf32>
    %32 = tpu.matmul %15, %31, %cst_24 {dimension_numbers = #tpu.dot_dimension_numbers<[1], [0], [0], [1], [0, 0, 1, 1], [], []>} : vector<32x32xbf16>, vector<32x32xbf16>, vector<32x32xf32> -> vector<32x32xf32>
    %c0_25 = arith.constant 0 : index
    %c0_26 = arith.constant 0 : index
    %33 = vector.load %arg7[%c0_25, %c0_26] : memref<1x32xf32, #tpu.memory_space<vmem>>, vector<1x32xf32>
    %34 = vector.broadcast %33 : vector<1x32xf32> to vector<32x32xf32>
    %35 = arith.addf %32, %34 : vector<32x32xf32>
    %36 = arith.truncf %35 : vector<32x32xf32> to vector<32x32xbf16>
    %c0_27 = arith.constant 0 : index
    %c0_28 = arith.constant 0 : index
    %37 = vector.load %arg8[%c0_27, %c0_28] : memref<32x32xbf16, #tpu.memory_space<vmem>>, vector<32x32xbf16>
    %cst_29 = arith.constant dense<0.000000e+00> : vector<32x32xf32>
    %38 = tpu.matmul %15, %37, %cst_29 {dimension_numbers = #tpu.dot_dimension_numbers<[1], [0], [0], [1], [0, 0, 1, 1], [], []>} : vector<32x32xbf16>, vector<32x32xbf16>, vector<32x32xf32> -> vector<32x32xf32>
    %c0_30 = arith.constant 0 : index
    %c0_31 = arith.constant 0 : index
    %39 = vector.load %arg9[%c0_30, %c0_31] : memref<1x32xf32, #tpu.memory_space<vmem>>, vector<1x32xf32>
    %40 = vector.broadcast %39 : vector<1x32xf32> to vector<32x32xf32>
    %41 = arith.addf %38, %40 : vector<32x32xf32>
    %42 = arith.truncf %41 : vector<32x32xf32> to vector<32x32xbf16>
    %c0_32 = arith.constant 0 : index
    %c0_33 = arith.constant 0 : index
    %43 = vector.load %arg12[%c0_32, %c0_33] : memref<32x4xbf16, #tpu.memory_space<vmem>>, vector<32x4xbf16>
    %c0_34 = arith.constant 0 : index
    %c0_35 = arith.constant 0 : index
    %44 = vector.load %arg13[%c0_34, %c0_35] : memref<4x32xbf16, #tpu.memory_space<vmem>>, vector<4x32xbf16>
    %45 = arith.mulf %20, %25 : vector<2x32xf32>
    %46 = arith.truncf %45 : vector<2x32xf32> to vector<2x32xbf16>
    %cst_36 = arith.constant dense<0.000000e+00> : vector<2x4xf32>
    %47 = tpu.matmul %46, %43, %cst_36 {dimension_numbers = #tpu.dot_dimension_numbers<[1], [0], [0], [1], [0, 0, 1, 1], [], []>} : vector<2x32xbf16>, vector<32x4xbf16>, vector<2x4xf32> -> vector<2x4xf32>
    %48 = arith.truncf %20 : vector<2x32xf32> to vector<2x32xbf16>
    %49 = vector.shape_cast %36 : vector<32x32xbf16> to vector<2x16x32xbf16>
    %50 = vector.shape_cast %48 : vector<2x32xbf16> to vector<2x1x32xbf16>
    %51 = vector.broadcast %50 : vector<2x1x32xbf16> to vector<2x16x32xbf16>
    %52 = arith.mulf %49, %51 : vector<2x16x32xbf16>
    %53 = vector.shape_cast %52 : vector<2x16x32xbf16> to vector<32x32xbf16>
    %cst_37 = arith.constant dense<0.000000e+00> : vector<32x4xf32>
    %54 = tpu.matmul %53, %43, %cst_37 {dimension_numbers = #tpu.dot_dimension_numbers<[1], [0], [0], [1], [0, 0, 1, 1], [], []>} : vector<32x32xbf16>, vector<32x4xbf16>, vector<32x4xf32> -> vector<32x4xf32>
    %55 = vector.shape_cast %54 : vector<32x4xf32> to vector<2x16x4xf32>
    %cst_38 = arith.constant dense<0xFF800000> : vector<2x4xf32>
    %56 = vector.multi_reduction <maximumf>, %55, %cst_38 [1] : vector<2x16x4xf32> to vector<2x4xf32>
    %57 = arith.maximumf %56, %47 : vector<2x4xf32>
    %58 = arith.subf %47, %57 : vector<2x4xf32>
    %59 = math.exp %58 : vector<2x4xf32>
    %60 = vector.shape_cast %57 : vector<2x4xf32> to vector<2x1x4xf32>
    %61 = vector.broadcast %60 : vector<2x1x4xf32> to vector<2x16x4xf32>
    %62 = arith.subf %55, %61 : vector<2x16x4xf32>
    %63 = math.exp %62 : vector<2x16x4xf32>
    %cst_39 = arith.constant dense<0.000000e+00> : vector<2x4xf32>
    %64 = vector.multi_reduction <add>, %63, %cst_39 [1] : vector<2x16x4xf32> to vector<2x4xf32>
    %65 = arith.addf %59, %64 : vector<2x4xf32>
    %cst_40 = arith.constant 1.000000e+00 : f32
    %66 = vector.broadcast %cst_40 : f32 to vector<2x4xf32>
    %67 = arith.divf %66, %65 : vector<2x4xf32>
    %68 = arith.mulf %59, %67 : vector<2x4xf32>
    %69 = vector.shape_cast %67 : vector<2x4xf32> to vector<2x1x4xf32>
    %70 = vector.broadcast %69 : vector<2x1x4xf32> to vector<2x16x4xf32>
    %71 = arith.mulf %63, %70 : vector<2x16x4xf32>
    %72 = arith.truncf %71 : vector<2x16x4xf32> to vector<2x16x4xbf16>
    %73 = vector.shape_cast %72 : vector<2x16x4xbf16> to vector<32x4xbf16>
    %cst_41 = arith.constant dense<0.000000e+00> : vector<32x32xf32>
    %74 = tpu.matmul %73, %44, %cst_41 {dimension_numbers = #tpu.dot_dimension_numbers<[1], [0], [0], [1], [0, 0, 1, 1], [], []>} : vector<32x4xbf16>, vector<4x32xbf16>, vector<32x32xf32> -> vector<32x32xf32>
    %75 = arith.truncf %74 : vector<32x32xf32> to vector<32x32xbf16>
    %76 = arith.mulf %75, %42 : vector<32x32xbf16>
    %77 = vector.shape_cast %76 : vector<32x32xbf16> to vector<2x16x32xbf16>
    %78 = arith.extf %77 : vector<2x16x32xbf16> to vector<2x16x32xf32>
    %cst_42 = arith.constant dense<0.000000e+00> : vector<2x32xf32>
    %79 = vector.multi_reduction <add>, %78, %cst_42 [1] : vector<2x16x32xf32> to vector<2x32xf32>
    %80 = arith.truncf %68 : vector<2x4xf32> to vector<2x4xbf16>
    %cst_43 = arith.constant dense<0.000000e+00> : vector<2x32xf32>
    %81 = tpu.matmul %80, %44, %cst_43 {dimension_numbers = #tpu.dot_dimension_numbers<[1], [0], [0], [1], [0, 0, 1, 1], [], []>} : vector<2x4xbf16>, vector<4x32xbf16>, vector<2x32xf32> -> vector<2x32xf32>
    %82 = arith.mulf %81, %30 : vector<2x32xf32>
    %83 = arith.addf %79, %82 : vector<2x32xf32>
    %84 = arith.truncf %83 : vector<2x32xf32> to vector<2x32xbf16>
    %c0_44 = arith.constant 0 : index
    %c0_45 = arith.constant 0 : index
    %85 = vector.load %arg10[%c0_44, %c0_45] : memref<32x128xbf16, #tpu.memory_space<vmem>>, vector<32x128xbf16>
    %cst_46 = arith.constant dense<0.000000e+00> : vector<2x128xf32>
    %86 = tpu.matmul %84, %85, %cst_46 {dimension_numbers = #tpu.dot_dimension_numbers<[1], [0], [0], [1], [0, 0, 1, 1], [], []>} : vector<2x32xbf16>, vector<32x128xbf16>, vector<2x128xf32> -> vector<2x128xf32>
    %c0_47 = arith.constant 0 : index
    %c0_48 = arith.constant 0 : index
    %87 = vector.load %arg11[%c0_47, %c0_48] : memref<1x128xf32, #tpu.memory_space<vmem>>, vector<1x128xf32>
    %88 = vector.broadcast %87 : vector<1x128xf32> to vector<2x128xf32>
    %89 = arith.addf %86, %88 : vector<2x128xf32>
    %c0_49 = arith.constant 0 : index
    %c0_50 = arith.constant 0 : index
    %90 = vector.load %arg14[%c0_49, %c0_50] : memref<2x128xf32, #tpu.memory_space<vmem>>, vector<2x128xf32>
    tpu.vector_store %arg14[%c0_49, %c0_50], %89 {strides = array<i32>} : memref<2x128xf32, #tpu.memory_space<vmem>>, vector<2x128xf32>,
    return
  }
  func.func @transform_0(%arg0: i32) -> (i32, i32, i32) {
    %c0_i32 = arith.constant 0 : i32
    %c0_i32_0 = arith.constant 0 : i32
    %c0_i32_1 = arith.constant 0 : i32
    return %arg0, %c0_i32, %c0_i32_0 : i32, i32, i32
  }
  func.func @transform_1(%arg0: i32) -> (i32, i32) {
    %c0_i32 = arith.constant 0 : i32
    %c0_i32_0 = arith.constant 0 : i32
    %c0_i32_1 = arith.constant 0 : i32
    return %c0_i32, %c0_i32_0 : i32, i32
  }
  func.func @transform_2(%arg0: i32) -> (i32, i32) {
    %c0_i32 = arith.constant 0 : i32
    %c0_i32_0 = arith.constant 0 : i32
    %c0_i32_1 = arith.constant 0 : i32
    return %c0_i32, %c0_i32_0 : i32, i32
  }
  func.func @transform_3(%arg0: i32) -> (i32, i32) {
    %c0_i32 = arith.constant 0 : i32
    %c0_i32_0 = arith.constant 0 : i32
    %c0_i32_1 = arith.constant 0 : i32
    return %c0_i32, %c0_i32_0 : i32, i32
  }
  func.func @transform_4(%arg0: i32) -> (i32, i32) {
    %c0_i32 = arith.constant 0 : i32
    %c0_i32_0 = arith.constant 0 : i32
    %c0_i32_1 = arith.constant 0 : i32
    return %c0_i32, %c0_i32_0 : i32, i32
  }
  func.func @transform_5(%arg0: i32) -> (i32, i32) {
    %c0_i32 = arith.constant 0 : i32
    %c0_i32_0 = arith.constant 0 : i32
    %c0_i32_1 = arith.constant 0 : i32
    return %c0_i32, %c0_i32_0 : i32, i32
  }
  func.func @transform_6(%arg0: i32) -> (i32, i32) {
    %c0_i32 = arith.constant 0 : i32
    %c0_i32_0 = arith.constant 0 : i32
    %c0_i32_1 = arith.constant 0 : i32
    return %c0_i32, %c0_i32_0 : i32, i32
  }
  func.func @transform_7(%arg0: i32) -> (i32, i32) {
    %c0_i32 = arith.constant 0 : i32
    %c0_i32_0 = arith.constant 0 : i32
    %c0_i32_1 = arith.constant 0 : i32
    return %c0_i32, %c0_i32_0 : i32, i32
  }
  func.func @transform_8(%arg0: i32) -> (i32, i32) {
    %c0_i32 = arith.constant 0 : i32
    %c0_i32_0 = arith.constant 0 : i32
    %c0_i32_1 = arith.constant 0 : i32
    return %c0_i32, %c0_i32_0 : i32, i32
  }
  func.func @transform_9(%arg0: i32) -> (i32, i32) {
    %c0_i32 = arith.constant 0 : i32
    %c0_i32_0 = arith.constant 0 : i32
    %c0_i32_1 = arith.constant 0 : i32
    return %c0_i32, %c0_i32_0 : i32, i32
  }
  func.func @transform_10(%arg0: i32) -> (i32, i32) {
    %c0_i32 = arith.constant 0 : i32
    %c0_i32_0 = arith.constant 0 : i32
    %c0_i32_1 = arith.constant 0 : i32
    return %c0_i32, %c0_i32_0 : i32, i32
  }
  func.func @transform_11(%arg0: i32) -> (i32, i32) {
    %c0_i32 = arith.constant 0 : i32
    %c0_i32_0 = arith.constant 0 : i32
    %c0_i32_1 = arith.constant 0 : i32
    return %c0_i32, %c0_i32_0 : i32, i32
  }
  func.func @transform_12(%arg0: i32) -> (i32, i32) {
    %c0_i32 = arith.constant 0 : i32
    %c0_i32_0 = arith.constant 0 : i32
    %c0_i32_1 = arith.constant 0 : i32
    return %c0_i32, %c0_i32_0 : i32, i32
  }
  func.func @transform_13(%arg0: i32) -> (i32, i32) {
    %c0_i32 = arith.constant 0 : i32
    %c0_i32_0 = arith.constant 0 : i32
    return %arg0, %c0_i32 : i32, i32
  }
}

</mosaic_0001>

<llo_original>
// kernel: tpu_custom_call.1
$region0: #{tpu_custom_call.1}
  #allocation0 [shape = 'u32[]', space=smem, size = 0x4, offset = 0x4, fixed_abs, tag = 'smem constant byte address 0x4 - core index']
  #allocation1 [shape = 'u32[72,128]{1,0:T(1,128)}', space=vmem, size = 0x9000, scoped, tag = 'internal scratch']
  %s0 = inlined_call_operand.vmem [shape: bf16[2,16,32], index: 0, kind: input, shape index: {}]
  %s1 = inlined_call_operand.hbm [shape: f32[1,32], index: 1, kind: input, shape index: {}]
  %s2 = inlined_call_operand.hbm [shape: f32[16,32], index: 2, kind: input, shape index: {}]
  %s3 = inlined_call_operand.hbm [shape: bf16[32,32], index: 3, kind: input, shape index: {}]
  %s4 = inlined_call_operand.vmem [shape: f32[1,32], index: 4, kind: input, shape index: {}]
  %s5 = inlined_call_operand.hbm [shape: bf16[32,32], index: 5, kind: input, shape index: {}]
  %s6 = inlined_call_operand.vmem [shape: f32[1,32], index: 6, kind: input, shape index: {}]
  %s7 = inlined_call_operand.hbm [shape: bf16[32,32], index: 7, kind: input, shape index: {}]
  %s8 = inlined_call_operand.vmem [shape: f32[1,32], index: 8, kind: input, shape index: {}]
  %s9 = inlined_call_operand.hbm [shape: bf16[32,128], index: 9, kind: input, shape index: {}]
  %s10 = inlined_call_operand.vmem [shape: f32[1,128], index: 10, kind: input, shape index: {}]
  %s11 = inlined_call_operand.vmem [shape: bf16[32,4], index: 11, kind: input, shape index: {}]
  %s12 = inlined_call_operand.vmem [shape: bf16[4,32], index: 12, kind: input, shape index: {}]
  %s13 = inlined_call_operand.hbm [shape: f32[2,128], index: 13, kind: output, shape index: {}]
  %s14 = sld [smem:[#allocation0]]
  $region86: #{tpu_custom_call.1} parent=0
    _
  %s16 = ssub.s32 1, %s14
  %s17 = scalar_select 0, %s16, %s14
  $region1: #{tpu_custom_call.1} parent=0
    #allocation2 [shape = 'u8[512]{0}', space=vmem, size = 0x400, scoped, tag = 'input window, operand 1, single buffered']
    #allocation3 [shape = 's32[1]{0}', space=sflag, size = 0x4, scoped, tag = 'scoped memory for tpu_custom_call.1']
    #allocation4 [shape = 's32[1]{0}', space=sflag, size = 0x4, scoped, tag = 'scoped memory for tpu_custom_call.1']
    #allocation5 [shape = 'u8[8192]{0}', space=vmem, size = 0x2000, scoped, tag = 'input window, operand 2, single buffered']
    #allocation6 [shape = 's32[1]{0}', space=sflag, size = 0x4, scoped, tag = 'scoped memory for tpu_custom_call.1']
    #allocation7 [shape = 'u8[8192]{0}', space=vmem, size = 0x2000, scoped, tag = 'input window, operand 3, single buffered']
    #allocation8 [shape = 'u8[8192]{0}', space=vmem, size = 0x2000, scoped, tag = 'input window, operand 5, single buffered']
    #allocation9 [shape = 's32[1]{0}', space=sflag, size = 0x4, scoped, tag = 'scoped memory for tpu_custom_call.1']
    #allocation10 [shape = 'u8[8192]{0}', space=vmem, size = 0x2000, scoped, tag = 'input window, operand 7, single buffered']
    #allocation11 [shape = 'u8[8192]{0}', space=vmem, size = 0x2000, scoped, tag = 'input window, operand 9, single buffered']
    #allocation12 [shape = 's32[1]{0}', space=sflag, size = 0x4, scoped, tag = 'scoped memory for tpu_custom_call.1']
    #allocation13 [shape = 'u8[1024]{0}', space=vmem, size = 0x400, scoped, tag = 'output window, operand 0, single buffered']
    %18 = vsyncpa [#allocation3], 0
    %19 = vsyncpa [#allocation6], 0
    %20 = vsyncpa [#allocation9], 0
    %21 = vsyncpa [#allocation12], 0
    %22 = vsyncpa [#allocation4], 0
    // Predicated region
    $region2: #{tpu_custom_call.1} parent=1 // pred_check
      _
    $region3: #{tpu_custom_call.1} parent=1 // pred_check_branch
      %24 = sbr.rel (0) target = $region5
    $region4: #{tpu_custom_call.1} parent=1 // pred_region
      _
    $region5: #{tpu_custom_call.1} parent=1 // pred_fallthru
      _
    // Predicated region
    $region6: #{tpu_custom_call.1} parent=1 // pred_check
      _
    $region7: #{tpu_custom_call.1} parent=1 // pred_check_branch
      %26 = sbr.rel (0) target = $region9
    $region8: #{tpu_custom_call.1} parent=1 // pred_region
      %28 = vsyncadd [#allocation3], 0
      %s30 = sshll.u32 %s1, 4
      %s31 = int_to_ptr.hbm [resolvable:$true] %s30
      %s32 = sshll.u32 [#allocation2], 4
      %s33 = int_to_ptr.vmem [resolvable:$true] %s32
      %35 = dma.hbm_to_vmem [thread:$0]  %s31, 16, %s33, [#allocation3]
    $region9: #{tpu_custom_call.1} parent=1 // pred_fallthru
      _
    // Predicated region
    $region10: #{tpu_custom_call.1} parent=1 // pred_check
      _
    $region11: #{tpu_custom_call.1} parent=1 // pred_check_branch
      %37 = sbr.rel (0) target = $region13
    $region12: #{tpu_custom_call.1} parent=1 // pred_region
      %39 = vsyncadd [#allocation6], 0
      %s40 = sshll.u32 %s2, 4
      %s41 = int_to_ptr.hbm [resolvable:$true] %s40
      %s42 = sshll.u32 [#allocation5], 4
      %s43 = int_to_ptr.vmem [resolvable:$true] %s42
      %48 = dma.hbm_to_vmem [thread:$0]  %s41, 256, %s43, [#allocation6], 128, 128, 8
    $region13: #{tpu_custom_call.1} parent=1 // pred_fallthru
      _
    // Predicated region
    $region14: #{tpu_custom_call.1} parent=1 // pred_check
      _
    $region15: #{tpu_custom_call.1} parent=1 // pred_check_branch
      %50 = sbr.rel (0) target = $region17
    $region16: #{tpu_custom_call.1} parent=1 // pred_region
      %52 = vsyncadd [#allocation6], 0
      %s53 = sshll.u32 %s3, 4
      %s54 = int_to_ptr.hbm [resolvable:$true] %s53
      %s55 = sshll.u32 [#allocation7], 4
      %s56 = int_to_ptr.vmem [resolvable:$true] %s55
      %61 = dma.hbm_to_vmem [thread:$0]  %s54, 256, %s56, [#allocation6], 64, 64, 4
    $region17: #{tpu_custom_call.1} parent=1 // pred_fallthru
      _
    // Predicated region
    $region18: #{tpu_custom_call.1} parent=1 // pred_check
      _
    $region19: #{tpu_custom_call.1} parent=1 // pred_check_branch
      %63 = sbr.rel (0) target = $region21
    $region20: #{tpu_custom_call.1} parent=1 // pred_region
      _
    $region21: #{tpu_custom_call.1} parent=1 // pred_fallthru
      _
    // Predicated region
    $region22: #{tpu_custom_call.1} parent=1 // pred_check
      _
    $region23: #{tpu_custom_call.1} parent=1 // pred_check_branch
      %65 = sbr.rel (0) target = $region25
    $region24: #{tpu_custom_call.1} parent=1 // pred_region
      %67 = vsyncadd [#allocation9], 0
      %s68 = sshll.u32 %s5, 4
      %s69 = int_to_ptr.hbm [resolvable:$true] %s68
      %s70 = sshll.u32 [#allocation8], 4
      %s71 = int_to_ptr.vmem [resolvable:$true] %s70
      %76 = dma.hbm_to_vmem [thread:$0]  %s69, 256, %s71, [#allocation9], 64, 64, 4
    $region25: #{tpu_custom_call.1} parent=1 // pred_fallthru
      _
    // Predicated region
    $region26: #{tpu_custom_call.1} parent=1 // pred_check
      _
    $region27: #{tpu_custom_call.1} parent=1 // pred_check_branch
      %78 = sbr.rel (0) target = $region29
    $region28: #{tpu_custom_call.1} parent=1 // pred_region
      _
    $region29: #{tpu_custom_call.1} parent=1 // pred_fallthru
      _
    // Predicated region
    $region30: #{tpu_custom_call.1} parent=1 // pred_check
      _
    $region31: #{tpu_custom_call.1} parent=1 // pred_check_branch
      %80 = sbr.rel (0) target = $region33
    $region32: #{tpu_custom_call.1} parent=1 // pred_region
      %82 = vsyncadd [#allocation9], 0
      %s83 = sshll.u32 %s7, 4
      %s84 = int_to_ptr.hbm [resolvable:$true] %s83
      %s85 = sshll.u32 [#allocation10], 4
      %s86 = int_to_ptr.vmem [resolvable:$true] %s85
      %91 = dma.hbm_to_vmem [thread:$0]  %s84, 256, %s86, [#allocation9], 64, 64, 4
    $region33: #{tpu_custom_call.1} parent=1 // pred_fallthru
      _
    // Predicated region
    $region34: #{tpu_custom_call.1} parent=1 // pred_check
      _
    $region35: #{tpu_custom_call.1} parent=1 // pred_check_branch
      %93 = sbr.rel (0) target = $region37
    $region36: #{tpu_custom_call.1} parent=1 // pred_region
      _
    $region37: #{tpu_custom_call.1} parent=1 // pred_fallthru
      _
    // Predicated region
    $region38: #{tpu_custom_call.1} parent=1 // pred_check
      _
    $region39: #{tpu_custom_call.1} parent=1 // pred_check_branch
      %95 = sbr.rel (0) target = $region41
    $region40: #{tpu_custom_call.1} parent=1 // pred_region
      %97 = vsyncadd [#allocation12], 0
      %s98 = sshll.u32 %s9, 4
      %s99 = int_to_ptr.hbm [resolvable:$true] %s98
      %s100 = sshll.u32 [#allocation11], 4
      %s101 = int_to_ptr.vmem [resolvable:$true] %s100
      %106 = dma.hbm_to_vmem [thread:$0]  %s99, 256, %s101, [#allocation12], 64, 64, 4
    $region41: #{tpu_custom_call.1} parent=1 // pred_fallthru
      _
    // Predicated region
    $region42: #{tpu_custom_call.1} parent=1 // pred_check
      _
    $region43: #{tpu_custom_call.1} parent=1 // pred_check_branch
      %108 = sbr.rel (0) target = $region45
    $region44: #{tpu_custom_call.1} parent=1 // pred_region
      _
    $region45: #{tpu_custom_call.1} parent=1 // pred_fallthru
      _
    // Predicated region
    $region46: #{tpu_custom_call.1} parent=1 // pred_check
      _
    $region47: #{tpu_custom_call.1} parent=1 // pred_check_branch
      %110 = sbr.rel (0) target = $region49
    $region48: #{tpu_custom_call.1} parent=1 // pred_region
      _
    $region49: #{tpu_custom_call.1} parent=1 // pred_fallthru
      _
    // Predicated region
    $region50: #{tpu_custom_call.1} parent=1 // pred_check
      _
    $region51: #{tpu_custom_call.1} parent=1 // pred_check_branch
      %112 = sbr.rel (0) target = $region53
    $region52: #{tpu_custom_call.1} parent=1 // pred_region
      _
    $region53: #{tpu_custom_call.1} parent=1 // pred_fallthru
      _
    // Predicated region
    $region54: #{tpu_custom_call.1} parent=1 // pred_check
      _
    $region55: #{tpu_custom_call.1} parent=1 // pred_check_branch
      %114 = sbr.rel (0) target = $region57
    $region56: #{tpu_custom_call.1} parent=1 // pred_region
      %116 = dma.done [#allocation3], 16
    $region57: #{tpu_custom_call.1} parent=1 // pred_fallthru
      _
    // Predicated region
    $region58: #{tpu_custom_call.1} parent=1 // pred_check
      _
    $region59: #{tpu_custom_call.1} parent=1 // pred_check_branch
      %118 = sbr.rel (0) target = $region61
    $region60: #{tpu_custom_call.1} parent=1 // pred_region
      %120 = dma.done [#allocation6], 256
    $region61: #{tpu_custom_call.1} parent=1 // pred_fallthru
      _
    // Predicated region
    $region62: #{tpu_custom_call.1} parent=1 // pred_check
      _
    $region63: #{tpu_custom_call.1} parent=1 // pred_check_branch
      %122 = sbr.rel (0) target = $region65
    $region64: #{tpu_custom_call.1} parent=1 // pred_region
      %124 = dma.done [#allocation6], 256
    $region65: #{tpu_custom_call.1} parent=1 // pred_fallthru
      _
    // Predicated region
    $region66: #{tpu_custom_call.1} parent=1 // pred_check
      _
    $region67: #{tpu_custom_call.1} parent=1 // pred_check_branch
      %126 = sbr.rel (0) target = $region69
    $region68: #{tpu_custom_call.1} parent=1 // pred_region
      %128 = dma.done [#allocation9], 256
    $region69: #{tpu_custom_call.1} parent=1 // pred_fallthru
      _
    // Predicated region
    $region70: #{tpu_custom_call.1} parent=1 // pred_check
      _
    $region71: #{tpu_custom_call.1} parent=1 // pred_check_branch
      %130 = sbr.rel (0) target = $region73
    $region72: #{tpu_custom_call.1} parent=1 // pred_region
      %132 = dma.done [#allocation9], 256
    $region73: #{tpu_custom_call.1} parent=1 // pred_fallthru
      _
    // Predicated region
    $region74: #{tpu_custom_call.1} parent=1 // pred_check
      _
    $region75: #{tpu_custom_call.1} parent=1 // pred_check_branch
      %134 = sbr.rel (0) target = $region77
    $region76: #{tpu_custom_call.1} parent=1 // pred_region
      %136 = dma.done [#allocation12], 256
    $region77: #{tpu_custom_call.1} parent=1 // pred_fallthru
      _
    %v138 = vld [vmem:[%s0] sm:$0xf]
    %v139 = vld [vmem:[%s0 + $0x4] sm:$0xf]
    %v140 = vld [vmem:[%s0 + $0x8] sm:$0xf]
    %v141 = vld [vmem:[%s0 + $0xc] sm:$0xf]
    %v142 = vunpack.c.l.bf16 %v138
    %v143 = vunpack.c.l.bf16 %v139
    %v144 = vunpack.c.l.bf16 %v140
    %v145 = vunpack.c.l.bf16 %v141
    %vm146 = vcmask 261120
    %v147 = vsel %vm146, %v142, 0.0
    %v148 = vsel %vm146, %v143, 0.0
    %v149 = vadd.f32 %v147, %v148
    %v150 = vrot.slane %v149, 4
    %v151 = vadd.f32 %v149, %v150
    %v152 = vrot.slane %v151, 2
    %v153 = vadd.f32 %v151, %v152
    %v154 = vrot.slane %v153, 1
    %v155 = vadd.f32 %v153, %v154
    %v156 = vsel %vm146, %v144, 0.0
    %v157 = vsel %vm146, %v145, 0.0
    %v158 = vadd.f32 %v156, %v157
    %v159 = vrot.slane %v158, 4
    %v160 = vadd.f32 %v158, %v159
    %v161 = vrot.slane %v160, 2
    %v162 = vadd.f32 %v160, %v161
    %v163 = vrot.slane %v162, 1
    %v164 = vadd.f32 %v162, %v163
    %v165 = vrcp.pop 16.0
    %v166 = vmul.f32 16.0, %v165
    %v167 = vsub.f32 1.0, %v166
    %v168 = vmul.f32 %v165, %v167
    %v169 = vadd.f32 %v165, %v168
    %vm170 = vweird.f32 %v165
    %v171 = vsel %vm170, %v165, %v169
    %v172 = vmul.f32 %v155, %v171
    %v173 = vmul.f32 %v164, %v171
    %v174 = vld [vmem:[#allocation2] sm:$0x1]
    %v176 = vperm.slane %v174, 0
    %v178 = vadd.f32 %v172, %v176
    %v179 = vadd.f32 %v173, %v176
    %v180 = vpack.c.bf16 %v178, %v178
    %v181 = vpack.c.bf16 %v179, %v179
    %v182 = vld [vmem:[#allocation5] sm:$0xff]
    %v183 = vld [vmem:[#allocation5 + $0x8] sm:$0xff]
    %v184 = vadd.f32 %v142, %v182
    %v185 = vadd.f32 %v143, %v183
    %v186 = vadd.f32 %v144, %v182
    %v187 = vadd.f32 %v145, %v183
    %v188 = vpack.c.bf16 %v184, %v184
    %v189 = vpack.c.bf16 %v185, %v185
    %v190 = vpack.c.bf16 %v186, %v186
    %v191 = vpack.c.bf16 %v187, %v187
    %v192 = vld [vmem:[#allocation7] sm:$0xf]
    %v193 = vld [vmem:[#allocation7 + $0x4] sm:$0xf]
    %v194 = vld [vmem:[#allocation7 + $0x8] sm:$0xf]
    %v195 = vld [vmem:[#allocation7 + $0xc] sm:$0xf]
    %v196 = vld [vmem:[%s4] sm:$0x1]
    %v198 = vperm.slane %v196, 0
    %v202 = vunpack.c.l.b16 %v180
    %v203 = vunpack.c.l.b16 %v181
    %v204 = vrot.slane %v203, 7
    %vm205 = vcmask 1041409
    %v206 = vsel %vm205, %v204, %v202
    %v207 = vpack.c.b16 %v206, %v206
    %v212 = vunpack.c.l.b16 %v192
    %v213 = vunpack.c.l.b16 %v193
    %v214 = vunpack.c.l.b16 %v194
    %v215 = vunpack.c.l.b16 %v195
    %v216 = vpack.c.b16 %v213, %v212
    %v217 = vpack.c.b16 %v215, %v214
    %v221 = vsel %vm146, %v207, 0
    %223 = vmatpush.bf16.msra.mxu0 0
    %224 = vmatpush.bf16.msra.mxu0 0
    %225 = vmatpush.bf16.msra.mxu0 0
    %226 = vmatpush.bf16.msra.mxu0 0
    %227 = vmatpush.bf16.msra.mxu0 0
    %228 = vmatpush.bf16.msra.mxu0 0
    %229 = vmatpush.bf16.msra.mxu0 %v217
    %230 = vmatpush.bf16.msra.mxu0 %v216
    %231 = vmatmul.bf16.gmra.mxu0 %v221
    %v232 = vpop.f32.mrf.mxu0
    %v233 = vadd.f32 %v198, %v232
    %v234 = vpop.f32.mrf.mxu0
    %235 = vdwg.mxu0
    %v236 = vld [vmem:[#allocation8] sm:$0xf]
    %v237 = vld [vmem:[#allocation8 + $0x4] sm:$0xf]
    %v238 = vld [vmem:[#allocation8 + $0x8] sm:$0xf]
    %v239 = vld [vmem:[#allocation8 + $0xc] sm:$0xf]
    %v240 = vld [vmem:[%s6] sm:$0x1]
    %v242 = vperm.slane %v240, 0
    %v248 = vunpack.c.l.b16 %v236
    %v249 = vunpack.c.l.b16 %v237
    %v250 = vunpack.c.l.b16 %v238
    %v251 = vunpack.c.l.b16 %v239
    %v252 = vpack.c.b16 %v249, %v248
    %v253 = vpack.c.b16 %v251, %v250
    %256 = vmatpush.bf16.msra.mxu0 0
    %257 = vmatpush.bf16.msra.mxu0 0
    %258 = vmatpush.bf16.msra.mxu0 0
    %259 = vmatpush.bf16.msra.mxu0 0
    %260 = vmatpush.bf16.msra.mxu0 0
    %261 = vmatpush.bf16.msra.mxu0 0
    %262 = vmatpush.bf16.msra.mxu0 %v253
    %263 = vmatpush.bf16.msra.mxu0 %v252
    %264 = vmatmul.bf16.gmra.mxu0 %v221
    %v265 = vpop.f32.mrf.mxu0
    %v266 = vadd.f32 %v242, %v265
    %v267 = vpop.f32.mrf.mxu0
    %268 = vdwg.mxu0
    %v269 = vld [vmem:[#allocation10] sm:$0xf]
    %v270 = vld [vmem:[#allocation10 + $0x4] sm:$0xf]
    %v271 = vld [vmem:[#allocation10 + $0x8] sm:$0xf]
    %v272 = vld [vmem:[#allocation10 + $0xc] sm:$0xf]
    %v273 = vld [vmem:[%s8] sm:$0x1]
    %v275 = vperm.slane %v273, 0
    %v281 = vunpack.c.l.b16 %v269
    %v282 = vunpack.c.l.b16 %v270
    %v283 = vunpack.c.l.b16 %v271
    %v284 = vunpack.c.l.b16 %v272
    %v285 = vpack.c.b16 %v282, %v281
    %v286 = vpack.c.b16 %v284, %v283
    %289 = vmatpush.bf16.msra.mxu0 0
    %290 = vmatpush.bf16.msra.mxu0 0
    %291 = vmatpush.bf16.msra.mxu0 0
    %292 = vmatpush.bf16.msra.mxu0 0
    %293 = vmatpush.bf16.msra.mxu0 0
    %294 = vmatpush.bf16.msra.mxu0 0
    %295 = vmatpush.bf16.msra.mxu0 %v286
    %296 = vmatpush.bf16.msra.mxu0 %v285
    %297 = vmatmul.bf16.gmra.mxu0 %v221
    %v298 = vpop.f32.mrf.mxu0
    %v299 = vadd.f32 %v275, %v298
    %v300 = vpop.f32.mrf.mxu0
    %301 = vdwg.mxu0
    %v306 = vunpack.c.l.b16 %v188
    %v307 = vunpack.c.l.b16 %v189
    %v308 = vunpack.c.l.b16 %v190
    %v309 = vunpack.c.l.b16 %v191
    %v310 = vpack.c.b16 %v307, %v306
    %v311 = vpack.c.b16 %v309, %v308
    %v313 = vsel %vm146, %v310, 0
    %v316 = vsel %vm146, %v311, 0
    %318 = vmatpush.bf16.msra.mxu0 0
    %319 = vmatpush.bf16.msra.mxu0 0
    %320 = vmatpush.bf16.msra.mxu0 0
    %321 = vmatpush.bf16.msra.mxu0 0
    %322 = vmatpush.bf16.msra.mxu0 0
    %323 = vmatpush.bf16.msra.mxu0 0
    %324 = vmatpush.bf16.msra.mxu0 %v253
    %325 = vmatpush.bf16.msra.mxu0 %v252
    %326 = vmatmul.bf16.gmra.mxu0 %v313
    %v327 = vpop.f32.mrf.mxu0
    %v328 = vadd.f32 %v242, %v327
    %v329 = vpop.f32.mrf.mxu0
    %v330 = vadd.f32 %v242, %v329
    %331 = vmatmul.bf16.gmra.mxu0 %v316
    %v332 = vpop.f32.mrf.mxu0
    %v333 = vadd.f32 %v242, %v332
    %v334 = vpop.f32.mrf.mxu0
    %v335 = vadd.f32 %v242, %v334
    %336 = vdwg.mxu0
    %v337 = vpack.c.bf16 %v328, %v328
    %v338 = vpack.c.bf16 %v330, %v330
    %v339 = vpack.c.bf16 %v333, %v333
    %v340 = vpack.c.bf16 %v335, %v335
    %341 = vmatpush.bf16.msra.mxu0 0
    %342 = vmatpush.bf16.msra.mxu0 0
    %343 = vmatpush.bf16.msra.mxu0 0
    %344 = vmatpush.bf16.msra.mxu0 0
    %345 = vmatpush.bf16.msra.mxu0 0
    %346 = vmatpush.bf16.msra.mxu0 0
    %347 = vmatpush.bf16.msra.mxu0 %v286
    %348 = vmatpush.bf16.msra.mxu0 %v285
    %349 = vmatmul.bf16.gmra.mxu0 %v313
    %v350 = vpop.f32.mrf.mxu0
    %v351 = vadd.f32 %v275, %v350
    %v352 = vpop.f32.mrf.mxu0
    %v353 = vadd.f32 %v275, %v352
    %354 = vmatmul.bf16.gmra.mxu0 %v316
    %v355 = vpop.f32.mrf.mxu0
    %v356 = vadd.f32 %v275, %v355
    %v357 = vpop.f32.mrf.mxu0
    %v358 = vadd.f32 %v275, %v357
    %359 = vdwg.mxu0
    %v360 = vpack.c.bf16 %v351, %v351
    %v361 = vpack.c.bf16 %v353, %v353
    %v362 = vpack.c.bf16 %v356, %v356
    %v363 = vpack.c.bf16 %v358, %v358
    %v364 = vld [vmem:[%s11] sm:$0xf]
    %v365 = vld [vmem:[%s11 + $0x4] sm:$0xf]
    %v366 = vld [vmem:[%s11 + $0x8] sm:$0xf]
    %v367 = vld [vmem:[%s11 + $0xc] sm:$0xf]
    %v368 = vld [vmem:[%s12] sm:$0x3]
    %v369 = vmul.f32 %v233, %v266
    %v370 = vpack.c.bf16 %v369, %v369
    %v375 = vunpack.c.l.b16 %v364
    %v376 = vunpack.c.l.b16 %v365
    %v377 = vunpack.c.l.b16 %v366
    %v378 = vunpack.c.l.b16 %v367
    %v379 = vpack.c.b16 %v376, %v375
    %v380 = vpack.c.b16 %v378, %v377
    %v384 = vsel %vm146, %v370, 0
    %386 = vmatpush.bf16.msra.mxu0 0
    %387 = vmatpush.bf16.msra.mxu0 0
    %388 = vmatpush.bf16.msra.mxu0 0
    %389 = vmatpush.bf16.msra.mxu0 0
    %390 = vmatpush.bf16.msra.mxu0 0
    %391 = vmatpush.bf16.msra.mxu0 0
    %392 = vmatpush.bf16.msra.mxu0 %v380
    %393 = vmatpush.bf16.msra.mxu0 %v379
    %394 = vmatmul.bf16.gmra.mxu0 %v384
    %v395 = vpop.f32.mrf.mxu0
    %v396 = vadd.f32 0.0, %v395
    %v397 = vpop.f32.mrf.mxu0
    %398 = vdwg.mxu0
    %v399 = vpack.c.bf16 %v233, %v233
    %v401 = vrot.slane %v399, 3
    %vm402 = vcmask 1040384
    %v405 = vsel %vm402, %v399, %v401
    %v407 = vunpack.i.l.s16 %v405
    %v408 = vunpack.i.h.s16 %v405
    %v409 = vpack.i.b16 %v407, %v407
    %v410 = vpack.i.b16 %v408, %v408
    %v411 = vperm.slane %v409, 0
    %v412 = vperm.slane %v410, 0
    %v414 = vpack.i.b16 %v411, %v411
    %v416 = vperm.slane %v414, 0
    %v418 = vpack.i.b16 %v412, %v412
    %v420 = vperm.slane %v418, 0
    %v421 = vunpack.c.l.bf16 %v337
    %v422 = vunpack.c.l.bf16 %v338
    %v423 = vunpack.c.l.bf16 %v339
    %v424 = vunpack.c.l.bf16 %v340
    %v425 = vunpack.c.l.bf16 %v416
    %v426 = vunpack.c.l.bf16 %v420
    %v427 = vmul.f32 %v421, %v425
    %v428 = vmul.f32 %v422, %v425
    %v429 = vmul.f32 %v423, %v426
    %v430 = vmul.f32 %v424, %v426
    %v431 = vpack.c.bf16 %v427, %v427
    %v432 = vpack.c.bf16 %v428, %v428
    %v433 = vpack.c.bf16 %v429, %v429
    %v434 = vpack.c.bf16 %v430, %v430
    %v439 = vunpack.c.l.b16 %v431
    %v440 = vunpack.c.l.b16 %v432
    %v441 = vunpack.c.l.b16 %v433
    %v442 = vunpack.c.l.b16 %v434
    %v443 = vpack.c.b16 %v440, %v439
    %v444 = vpack.c.b16 %v442, %v441
    %v446 = vsel %vm146, %v443, 0
    %v449 = vsel %vm146, %v444, 0
    %451 = vmatpush.bf16.msra.mxu0 0
    %452 = vmatpush.bf16.msra.mxu0 0
    %453 = vmatpush.bf16.msra.mxu0 0
    %454 = vmatpush.bf16.msra.mxu0 0
    %455 = vmatpush.bf16.msra.mxu0 0
    %456 = vmatpush.bf16.msra.mxu0 0
    %457 = vmatpush.bf16.msra.mxu0 %v380
    %458 = vmatpush.bf16.msra.mxu0 %v379
    %459 = vmatmul.bf16.gmra.mxu0 %v446
    %v460 = vpop.f32.mrf.mxu0
    %v461 = vadd.f32 0.0, %v460
    %v462 = vpop.f32.mrf.mxu0
    %v463 = vadd.f32 0.0, %v462
    %464 = vmatmul.bf16.gmra.mxu0 %v449
    %v465 = vpop.f32.mrf.mxu0
    %v466 = vadd.f32 0.0, %v465
    %v467 = vpop.f32.mrf.mxu0
    %v468 = vadd.f32 0.0, %v467
    %469 = vdwg.mxu0
    %vm470 = vcmask 31744
    %v471 = vsel %vm470, %v461, -inf
    %v472 = vsel %vm470, %v463, -inf
    %v473 = vmax.f32 %v471, %v472
    %v474 = vrot.slane %v473, 4
    %v475 = vmax.f32 %v473, %v474
    %v476 = vrot.slane %v475, 2
    %v477 = vmax.f32 %v475, %v476
    %v478 = vrot.slane %v477, 1
    %v479 = vmax.f32 %v477, %v478
    %v480 = vsel %vm470, %v466, -inf
    %v481 = vsel %vm470, %v468, -inf
    %v482 = vmax.f32 %v480, %v481
    %v483 = vrot.slane %v482, 4
    %v484 = vmax.f32 %v482, %v483
    %v485 = vrot.slane %v484, 2
    %v486 = vmax.f32 %v484, %v485
    %v487 = vrot.slane %v486, 1
    %v488 = vmax.f32 %v486, %v487
    %v490 = vrot.slane %v396, 1
    %v493 = vmax.f32 %v479, %v396
    %v494 = vmax.f32 %v488, %v490
    %v497 = vrot.slane %v494, 7
    %v498 = vsel %vm205, %v497, %v493
    %v500 = vsub.f32 %v396, %v498
    %v501 = vmul.f32 %v500, 1.442695
    %v502 = vpow.pop %v501
    %v503 = vperm.slane %v493, 0
    %v504 = vperm.slane %v494, 0
    %v505 = vsub.f32 %v461, %v503
    %v506 = vsub.f32 %v463, %v503
    %v507 = vsub.f32 %v466, %v504
    %v508 = vsub.f32 %v468, %v504
    %v509 = vmul.f32 %v505, 1.442695
    %v510 = vpow.pop %v509
    %v511 = vmul.f32 %v506, 1.442695
    %v512 = vpow.pop %v511
    %v513 = vmul.f32 %v507, 1.442695
    %v514 = vpow.pop %v513
    %v515 = vmul.f32 %v508, 1.442695
    %v516 = vpow.pop %v515
    %v517 = vsel %vm470, %v510, 0.0
    %v518 = vsel %vm470, %v512, 0.0
    %v519 = vadd.f32 %v517, %v518
    %v520 = vrot.slane %v519, 4
    %v521 = vadd.f32 %v519, %v520
    %v522 = vrot.slane %v521, 2
    %v523 = vadd.f32 %v521, %v522
    %v524 = vrot.slane %v523, 1
    %v525 = vadd.f32 %v523, %v524
    %v526 = vsel %vm470, %v514, 0.0
    %v527 = vsel %vm470, %v516, 0.0
    %v528 = vadd.f32 %v526, %v527
    %v529 = vrot.slane %v528, 4
    %v530 = vadd.f32 %v528, %v529
    %v531 = vrot.slane %v530, 2
    %v532 = vadd.f32 %v530, %v531
    %v533 = vrot.slane %v532, 1
    %v534 = vadd.f32 %v532, %v533
    %v537 = vsel %vm205, %v534, %v525
    %v539 = vadd.f32 %v502, %v537
    %v540 = vrcp.pop %v539
    %v541 = vmul.f32 %v539, %v540
    %v542 = vsub.f32 1.0, %v541
    %v543 = vmul.f32 %v540, %v542
    %v544 = vadd.f32 %v540, %v543
    %vm545 = vweird.f32 %v539
    %vm546 = vweird.f32 %v540
    %vm547 = vmor %vm545, %vm546
    %v548 = vsel %vm547, %v540, %v544
    %v549 = vand.u32 2147483647, %v539
    %vm550 = vcmp.eq.f32.partialorder %v549, 8.507059e+37
    %v551 = vand.u32 %v539, 2147483648
    %v552 = vor.u32 1.1754944e-38, %v551
    %v553 = vsel %vm550, %v552, %v548
    %v554 = vmul.f32 1.0, %v553
    %v555 = vmul.f32 %v502, %v554
    %v557 = vrot.slane %v554, 1
    %v558 = vperm.slane %v554, 0
    %v559 = vperm.slane %v557, 0
    %v562 = vmul.f32 %v510, %v558
    %v563 = vmul.f32 %v512, %v558
    %v564 = vmul.f32 %v514, %v559
    %v565 = vmul.f32 %v516, %v559
    %v566 = vpack.c.bf16 %v562, %v562
    %v567 = vpack.c.bf16 %v563, %v563
    %v568 = vpack.c.bf16 %v564, %v564
    %v569 = vpack.c.bf16 %v565, %v565
    %v574 = vunpack.c.l.b16 %v566
    %v575 = vunpack.c.l.b16 %v567
    %v576 = vunpack.c.l.b16 %v568
    %v577 = vunpack.c.l.b16 %v569
    %v578 = vpack.c.b16 %v575, %v574
    %v579 = vpack.c.b16 %v577, %v576
    %v581 = vsel %vm470, %v578, 0
    %v584 = vsel %vm470, %v579, 0
    %vm586 = vcmask 1041408
    %v588 = vsel %vm586, %v368, 0
    %590 = vmatpush.bf16.msra.mxu0 0
    %591 = vmatpush.bf16.msra.mxu0 0
    %592 = vmatpush.bf16.msra.mxu0 0
    %593 = vmatpush.bf16.msra.mxu0 0
    %594 = vmatpush.bf16.msra.mxu0 0
    %595 = vmatpush.bf16.msra.mxu0 0
    %596 = vmatpush.bf16.msra.mxu0 0
    %597 = vmatpush.bf16.msra.mxu0 %v588
    %598 = vmatmul.bf16.gmra.mxu0 %v581
    %v599 = vpop.f32.mrf.mxu0
    %v600 = vadd.f32 0.0, %v599
    %v601 = vpop.f32.mrf.mxu0
    %v602 = vadd.f32 0.0, %v601
    %603 = vmatmul.bf16.gmra.mxu0 %v584
    %v604 = vpop.f32.mrf.mxu0
    %v605 = vadd.f32 0.0, %v604
    %v606 = vpop.f32.mrf.mxu0
    %v607 = vadd.f32 0.0, %v606
    %608 = vdwg.mxu0
    %v609 = vpack.c.bf16 %v600, %v600
    %v610 = vpack.c.bf16 %v602, %v602
    %v611 = vpack.c.bf16 %v605, %v605
    %v612 = vpack.c.bf16 %v607, %v607
    %v613 = vunpack.c.l.bf16 %v609
    %v614 = vunpack.c.l.bf16 %v610
    %v615 = vunpack.c.l.bf16 %v611
    %v616 = vunpack.c.l.bf16 %v612
    %v617 = vunpack.c.l.bf16 %v360
    %v618 = vunpack.c.l.bf16 %v361
    %v619 = vunpack.c.l.bf16 %v362
    %v620 = vunpack.c.l.bf16 %v363
    %v621 = vmul.f32 %v613, %v617
    %v622 = vmul.f32 %v614, %v618
    %v623 = vmul.f32 %v615, %v619
    %v624 = vmul.f32 %v616, %v620
    %v625 = vpack.c.bf16 %v621, %v621
    %v626 = vpack.c.bf16 %v622, %v622
    %v627 = vpack.c.bf16 %v623, %v623
    %v628 = vpack.c.bf16 %v624, %v624
    %v629 = vunpack.c.l.bf16 %v625
    %v630 = vunpack.c.l.bf16 %v626
    %v631 = vunpack.c.l.bf16 %v627
    %v632 = vunpack.c.l.bf16 %v628
    %v633 = vsel %vm146, %v629, 0.0
    %v634 = vsel %vm146, %v630, 0.0
    %v635 = vadd.f32 %v633, %v634
    %v636 = vrot.slane %v635, 4
    %v637 = vadd.f32 %v635, %v636
    %v638 = vrot.slane %v637, 2
    %v639 = vadd.f32 %v637, %v638
    %v640 = vrot.slane %v639, 1
    %v641 = vadd.f32 %v639, %v640
    %v642 = vsel %vm146, %v631, 0.0
    %v643 = vsel %vm146, %v632, 0.0
    %v644 = vadd.f32 %v642, %v643
    %v645 = vrot.slane %v644, 4
    %v646 = vadd.f32 %v644, %v645
    %v647 = vrot.slane %v646, 2
    %v648 = vadd.f32 %v646, %v647
    %v649 = vrot.slane %v648, 1
    %v650 = vadd.f32 %v648, %v649
    %v651 = vpack.c.bf16 %v555, %v555
    %v653 = vsel %vm470, %v651, 0
    %655 = vmatpush.bf16.msra.mxu0 0
    %656 = vmatpush.bf16.msra.mxu0 0
    %657 = vmatpush.bf16.msra.mxu0 0
    %658 = vmatpush.bf16.msra.mxu0 0
    %659 = vmatpush.bf16.msra.mxu0 0
    %660 = vmatpush.bf16.msra.mxu0 0
    %661 = vmatpush.bf16.msra.mxu0 0
    %662 = vmatpush.bf16.msra.mxu0 %v588
    %663 = vmatmul.bf16.gmra.mxu0 %v653
    %v664 = vpop.f32.mrf.mxu0
    %v665 = vadd.f32 0.0, %v664
    %v666 = vpop.f32.mrf.mxu0
    %667 = vdwg.mxu0
    %v668 = vmul.f32 %v665, %v299
    %v670 = vrot.slane %v668, 1
    %v673 = vadd.f32 %v641, %v668
    %v674 = vadd.f32 %v650, %v670
    %v675 = vpack.c.bf16 %v673, %v673
    %v676 = vpack.c.bf16 %v674, %v674
    %v677 = vld [vmem:[#allocation11] sm:$0xf]
    %v678 = vld [vmem:[#allocation11 + $0x4] sm:$0xf]
    %v679 = vld [vmem:[#allocation11 + $0x8] sm:$0xf]
    %v680 = vld [vmem:[#allocation11 + $0xc] sm:$0xf]
    %v681 = vld [vmem:[%s10] sm:$0x1]
    %v683 = vperm.slane %v681, 0
    %v687 = vunpack.c.l.b16 %v675
    %v688 = vunpack.c.l.b16 %v676
    %v689 = vrot.slane %v688, 7
    %v690 = vsel %vm205, %v689, %v687
    %v691 = vpack.c.b16 %v690, %v690
    %v696 = vunpack.c.l.b16 %v677
    %v697 = vunpack.c.l.b16 %v678
    %v698 = vunpack.c.l.b16 %v679
    %v699 = vunpack.c.l.b16 %v680
    %v700 = vpack.c.b16 %v697, %v696
    %v701 = vpack.c.b16 %v699, %v698
    %v705 = vsel %vm146, %v691, 0
    %707 = vmatpush.bf16.msra.mxu0 0
    %708 = vmatpush.bf16.msra.mxu0 0
    %709 = vmatpush.bf16.msra.mxu0 0
    %710 = vmatpush.bf16.msra.mxu0 0
    %711 = vmatpush.bf16.msra.mxu0 0
    %712 = vmatpush.bf16.msra.mxu0 0
    %713 = vmatpush.bf16.msra.mxu0 %v701
    %714 = vmatpush.bf16.msra.mxu0 %v700
    %715 = vmatmul.bf16.gmra.mxu0 %v705
    %v716 = vpop.f32.mrf.mxu0
    %v717 = vadd.f32 %v683, %v716
    %v718 = vpop.f32.mrf.mxu0
    %719 = vdwg.mxu0
    %720 = vst [vmem:[#allocation13] sm:$0x3] %v717
    // Predicated region
    $region78: #{tpu_custom_call.1} parent=1 // pred_check
      _
    $region79: #{tpu_custom_call.1} parent=1 // pred_check_branch
      %722 = sbr.rel (0) target = $region81
    $region80: #{tpu_custom_call.1} parent=1 // pred_region
      %724 = vsyncadd [#allocation4], 0
      %s726 = sshll.u32 [#allocation13], 4
      %s727 = int_to_ptr.vmem [resolvable:$true] %s726
      %s728 = sshll.u32 %s13, 4
      %s729 = int_to_ptr.hbm [resolvable:$true] %s728
      %731 = dma.vmem_to_hbm [thread:$0]  %s727, 32, %s729, [#allocation4]
    $region81: #{tpu_custom_call.1} parent=1 // pred_fallthru
      _
    // Predicated region
    $region82: #{tpu_custom_call.1} parent=1 // pred_check
      _
    $region83: #{tpu_custom_call.1} parent=1 // pred_check_branch
      %733 = sbr.rel (0) target = $region85
    $region84: #{tpu_custom_call.1} parent=1 // pred_region
      %735 = dma.done [#allocation4], 32
    $region85: #{tpu_custom_call.1} parent=1 // pred_fallthru
      _
    %736 = vsyncpa [#allocation3], 1
    %737 = vsyncpa [#allocation6], 1
    %738 = vsyncpa [#allocation9], 1
    %739 = vsyncpa [#allocation12], 1
    %740 = vsyncpa [#allocation4], 1

// kernel: tpu_custom_call.1
$region0: #{tpu_custom_call.1}
  #allocation0 [shape = 'u32[]', space=smem, size = 0x4, offset = 0x4, fixed_abs, tag = 'smem constant byte address 0x4 - core index']
  #allocation1 [shape = 'u32[72,128]{1,0:T(1,128)}', space=vmem, size = 0x9000, scoped, tag = 'internal scratch']
  %s0 = inlined_call_operand.vmem [shape: bf16[2,16,32], index: 0, kind: input, shape index: {}]
  %s1 = inlined_call_operand.hbm [shape: f32[1,32], index: 1, kind: input, shape index: {}]
  %s2 = inlined_call_operand.hbm [shape: f32[16,32], index: 2, kind: input, shape index: {}]
  %s3 = inlined_call_operand.hbm [shape: bf16[32,32], index: 3, kind: input, shape index: {}]
  %s4 = inlined_call_operand.vmem [shape: f32[1,32], index: 4, kind: input, shape index: {}]
  %s5 = inlined_call_operand.hbm [shape: bf16[32,32], index: 5, kind: input, shape index: {}]
  %s6 = inlined_call_operand.vmem [shape: f32[1,32], index: 6, kind: input, shape index: {}]
  %s7 = inlined_call_operand.hbm [shape: bf16[32,32], index: 7, kind: input, shape index: {}]
  %s8 = inlined_call_operand.vmem [shape: f32[1,32], index: 8, kind: input, shape index: {}]
  %s9 = inlined_call_operand.hbm [shape: bf16[32,128], index: 9, kind: input, shape index: {}]
  %s10 = inlined_call_operand.vmem [shape: f32[1,128], index: 10, kind: input, shape index: {}]
  %s11 = inlined_call_operand.vmem [shape: bf16[32,4], index: 11, kind: input, shape index: {}]
  %s12 = inlined_call_operand.vmem [shape: bf16[4,32], index: 12, kind: input, shape index: {}]
  %s13 = inlined_call_operand.hbm [shape: f32[2,128], index: 13, kind: output, shape index: {}]
  %s14 = sld [smem:[#allocation0]]
  $region86: #{tpu_custom_call.1} parent=0
    _
  %s16 = ssub.s32 1, %s14
  %s17 = scalar_select 0, %s16, %s14
  $region1: #{tpu_custom_call.1} parent=0
    #allocation2 [shape = 'u8[512]{0}', space=vmem, size = 0x400, scoped, tag = 'input window, operand 1, single buffered']
    #allocation3 [shape = 's32[1]{0}', space=sflag, size = 0x4, scoped, tag = 'scoped memory for tpu_custom_call.1']
    #allocation4 [shape = 's32[1]{0}', space=sflag, size = 0x4, scoped, tag = 'scoped memory for tpu_custom_call.1']
    #allocation5 [shape = 'u8[8192]{0}', space=vmem, size = 0x2000, scoped, tag = 'input window, operand 2, single buffered']
    #allocation6 [shape = 's32[1]{0}', space=sflag, size = 0x4, scoped, tag = 'scoped memory for tpu_custom_call.1']
    #allocation7 [shape = 'u8[8192]{0}', space=vmem, size = 0x2000, scoped, tag = 'input window, operand 3, single buffered']
    #allocation8 [shape = 'u8[8192]{0}', space=vmem, size = 0x2000, scoped, tag = 'input window, operand 5, single buffered']
    #allocation9 [shape = 's32[1]{0}', space=sflag, size = 0x4, scoped, tag = 'scoped memory for tpu_custom_call.1']
    #allocation10 [shape = 'u8[8192]{0}', space=vmem, size = 0x2000, scoped, tag = 'input window, operand 7, single buffered']
    #allocation11 [shape = 'u8[8192]{0}', space=vmem, size = 0x2000, scoped, tag = 'input window, operand 9, single buffered']
    #allocation12 [shape = 's32[1]{0}', space=sflag, size = 0x4, scoped, tag = 'scoped memory for tpu_custom_call.1']
    #allocation13 [shape = 'u8[1024]{0}', space=vmem, size = 0x400, scoped, tag = 'output window, operand 0, single buffered']
    %18 = vsyncpa [#allocation3], 0
    %19 = vsyncpa [#allocation6], 0
    %20 = vsyncpa [#allocation9], 0
    %21 = vsyncpa [#allocation12], 0
    %22 = vsyncpa [#allocation4], 0
    // Predicated region
    $region2: #{tpu_custom_call.1} parent=1 // pred_check
      _
    $region3: #{tpu_custom_call.1} parent=1 // pred_check_branch
      %24 = sbr.rel (0) target = $region5
    $region4: #{tpu_custom_call.1} parent=1 // pred_region
      _
    $region5: #{tpu_custom_call.1} parent=1 // pred_fallthru
      _
    // Predicated region
    $region6: #{tpu_custom_call.1} parent=1 // pred_check
      _
    $region7: #{tpu_custom_call.1} parent=1 // pred_check_branch
      %26 = sbr.rel (0) target = $region9
    $region8: #{tpu_custom_call.1} parent=1 // pred_region
      %28 = vsyncadd [#allocation3], 0
      %s30 = sshll.u32 %s1, 4
      %s31 = int_to_ptr.hbm [resolvable:$true] %s30
      %s32 = sshll.u32 [#allocation2], 4
      %s33 = int_to_ptr.vmem [resolvable:$true] %s32
      %35 = dma.hbm_to_vmem [thread:$0]  %s31, 16, %s33, [#allocation3]
    $region9: #{tpu_custom_call.1} parent=1 // pred_fallthru
      _
    // Predicated region
    $region10: #{tpu_custom_call.1} parent=1 // pred_check
      _
    $region11: #{tpu_custom_call.1} parent=1 // pred_check_branch
      %37 = sbr.rel (0) target = $region13
    $region12: #{tpu_custom_call.1} parent=1 // pred_region
      %39 = vsyncadd [#allocation6], 0
      %s40 = sshll.u32 %s2, 4
      %s41 = int_to_ptr.hbm [resolvable:$true] %s40
      %s42 = sshll.u32 [#allocation5], 4
      %s43 = int_to_ptr.vmem [resolvable:$true] %s42
      %48 = dma.hbm_to_vmem [thread:$0]  %s41, 256, %s43, [#allocation6], 128, 128, 8
    $region13: #{tpu_custom_call.1} parent=1 // pred_fallthru
      _
    // Predicated region
    $region14: #{tpu_custom_call.1} parent=1 // pred_check
      _
    $region15: #{tpu_custom_call.1} parent=1 // pred_check_branch
      %50 = sbr.rel (0) target = $region17
    $region16: #{tpu_custom_call.1} parent=1 // pred_region
      %52 = vsyncadd [#allocation6], 0
      %s53 = sshll.u32 %s3, 4
      %s54 = int_to_ptr.hbm [resolvable:$true] %s53
      %s55 = sshll.u32 [#allocation7], 4
      %s56 = int_to_ptr.vmem [resolvable:$true] %s55
      %61 = dma.hbm_to_vmem [thread:$0]  %s54, 256, %s56, [#allocation6], 64, 64, 4
    $region17: #{tpu_custom_call.1} parent=1 // pred_fallthru
      _
    // Predicated region
    $region18: #{tpu_custom_call.1} parent=1 // pred_check
      _
    $region19: #{tpu_custom_call.1} parent=1 // pred_check_branch
      %63 = sbr.rel (0) target = $region21
    $region20: #{tpu_custom_call.1} parent=1 // pred_region
      _
    $region21: #{tpu_custom_call.1} parent=1 // pred_fallthru
      _
    // Predicated region
    $region22: #{tpu_custom_call.1} parent=1 // pred_check
      _
    $region23: #{tpu_custom_call.1} parent=1 // pred_check_branch
      %65 = sbr.rel (0) target = $region25
    $region24: #{tpu_custom_call.1} parent=1 // pred_region
      %67 = vsyncadd [#allocation9], 0
      %s68 = sshll.u32 %s5, 4
      %s69 = int_to_ptr.hbm [resolvable:$true] %s68
      %s70 = sshll.u32 [#allocation8], 4
      %s71 = int_to_ptr.vmem [resolvable:$true] %s70
      %76 = dma.hbm_to_vmem [thread:$0]  %s69, 256, %s71, [#allocation9], 64, 64, 4
    $region25: #{tpu_custom_call.1} parent=1 // pred_fallthru
      _
    // Predicated region
    $region26: #{tpu_custom_call.1} parent=1 // pred_check
      _
    $region27: #{tpu_custom_call.1} parent=1 // pred_check_branch
      %78 = sbr.rel (0) target = $region29
    $region28: #{tpu_custom_call.1} parent=1 // pred_region
      _
    $region29: #{tpu_custom_call.1} parent=1 // pred_fallthru
      _
    // Predicated region
    $region30: #{tpu_custom_call.1} parent=1 // pred_check
      _
    $region31: #{tpu_custom_call.1} parent=1 // pred_check_branch
      %80 = sbr.rel (0) target = $region33
    $region32: #{tpu_custom_call.1} parent=1 // pred_region
      %82 = vsyncadd [#allocation9], 0
      %s83 = sshll.u32 %s7, 4
      %s84 = int_to_ptr.hbm [resolvable:$true] %s83
      %s85 = sshll.u32 [#allocation10], 4
      %s86 = int_to_ptr.vmem [resolvable:$true] %s85
      %91 = dma.hbm_to_vmem [thread:$0]  %s84, 256, %s86, [#allocation9], 64, 64, 4
    $region33: #{tpu_custom_call.1} parent=1 // pred_fallthru
      _
    // Predicated region
    $region34: #{tpu_custom_call.1} parent=1 // pred_check
      _
    $region35: #{tpu_custom_call.1} parent=1 // pred_check_branch
      %93 = sbr.rel (0) target = $region37
    $region36: #{tpu_custom_call.1} parent=1 // pred_region
      _
    $region37: #{tpu_custom_call.1} parent=1 // pred_fallthru
      _
    // Predicated region
    $region38: #{tpu_custom_call.1} parent=1 // pred_check
      _
    $region39: #{tpu_custom_call.1} parent=1 // pred_check_branch
      %95 = sbr.rel (0) target = $region41
    $region40: #{tpu_custom_call.1} parent=1 // pred_region
      %97 = vsyncadd [#allocation12], 0
      %s98 = sshll.u32 %s9, 4
      %s99 = int_to_ptr.hbm [resolvable:$true] %s98
      %s100 = sshll.u32 [#allocation11], 4
      %s101 = int_to_ptr.vmem [resolvable:$true] %s100
      %106 = dma.hbm_to_vmem [thread:$0]  %s99, 256, %s101, [#allocation12], 64, 64, 4
    $region41: #{tpu_custom_call.1} parent=1 // pred_fallthru
      _
    // Predicated region
    $region42: #{tpu_custom_call.1} parent=1 // pred_check
      _
    $region43: #{tpu_custom_call.1} parent=1 // pred_check_branch
      %108 = sbr.rel (0) target = $region45
    $region44: #{tpu_custom_call.1} parent=1 // pred_region
      _
    $region45: #{tpu_custom_call.1} parent=1 // pred_fallthru
      _
    // Predicated region
    $region46: #{tpu_custom_call.1} parent=1 // pred_check
      _
    $region47: #{tpu_custom_call.1} parent=1 // pred_check_branch
      %110 = sbr.rel (0) target = $region49
    $region48: #{tpu_custom_call.1} parent=1 // pred_region
      _
    $region49: #{tpu_custom_call.1} parent=1 // pred_fallthru
      _
    // Predicated region
    $region50: #{tpu_custom_call.1} parent=1 // pred_check
      _
    $region51: #{tpu_custom_call.1} parent=1 // pred_check_branch
      %112 = sbr.rel (0) target = $region53
    $region52: #{tpu_custom_call.1} parent=1 // pred_region
      _
    $region53: #{tpu_custom_call.1} parent=1 // pred_fallthru
      _
    // Predicated region
    $region54: #{tpu_custom_call.1} parent=1 // pred_check
      _
    $region55: #{tpu_custom_call.1} parent=1 // pred_check_branch
      %114 = sbr.rel (0) target = $region57
    $region56: #{tpu_custom_call.1} parent=1 // pred_region
      %116 = dma.done [#allocation3], 16
    $region57: #{tpu_custom_call.1} parent=1 // pred_fallthru
      _
    // Predicated region
    $region58: #{tpu_custom_call.1} parent=1 // pred_check
      _
    $region59: #{tpu_custom_call.1} parent=1 // pred_check_branch
      %118 = sbr.rel (0) target = $region61
    $region60: #{tpu_custom_call.1} parent=1 // pred_region
      %120 = dma.done [#allocation6], 256
    $region61: #{tpu_custom_call.1} parent=1 // pred_fallthru
      _
    // Predicated region
    $region62: #{tpu_custom_call.1} parent=1 // pred_check
      _
    $region63: #{tpu_custom_call.1} parent=1 // pred_check_branch
      %122 = sbr.rel (0) target = $region65
    $region64: #{tpu_custom_call.1} parent=1 // pred_region
      %124 = dma.done [#allocation6], 256
    $region65: #{tpu_custom_call.1} parent=1 // pred_fallthru
      _
    // Predicated region
    $region66: #{tpu_custom_call.1} parent=1 // pred_check
      _
    $region67: #{tpu_custom_call.1} parent=1 // pred_check_branch
      %126 = sbr.rel (0) target = $region69
    $region68: #{tpu_custom_call.1} parent=1 // pred_region
      %128 = dma.done [#allocation9], 256
    $region69: #{tpu_custom_call.1} parent=1 // pred_fallthru
      _
    // Predicated region
    $region70: #{tpu_custom_call.1} parent=1 // pred_check
      _
    $region71: #{tpu_custom_call.1} parent=1 // pred_check_branch
      %130 = sbr.rel (0) target = $region73
    $region72: #{tpu_custom_call.1} parent=1 // pred_region
      %132 = dma.done [#allocation9], 256
    $region73: #{tpu_custom_call.1} parent=1 // pred_fallthru
      _
    // Predicated region
    $region74: #{tpu_custom_call.1} parent=1 // pred_check
      _
    $region75: #{tpu_custom_call.1} parent=1 // pred_check_branch
      %134 = sbr.rel (0) target = $region77
    $region76: #{tpu_custom_call.1} parent=1 // pred_region
      %136 = dma.done [#allocation12], 256
    $region77: #{tpu_custom_call.1} parent=1 // pred_fallthru
      _
    %v138 = vld [vmem:[%s0] sm:$0xf]
    %v139 = vld [vmem:[%s0 + $0x4] sm:$0xf]
    %v140 = vld [vmem:[%s0 + $0x8] sm:$0xf]
    %v141 = vld [vmem:[%s0 + $0xc] sm:$0xf]
    %v142 = vunpack.c.l.bf16 %v138
    %v143 = vunpack.c.l.bf16 %v139
    %v144 = vunpack.c.l.bf16 %v140
    %v145 = vunpack.c.l.bf16 %v141
    %vm146 = vcmask 261120
    %v147 = vsel %vm146, %v142, 0.0
    %v148 = vsel %vm146, %v143, 0.0
    %v149 = vadd.f32 %v147, %v148
    %v150 = vrot.slane %v149, 4
    %v151 = vadd.f32 %v149, %v150
    %v152 = vrot.slane %v151, 2
    %v153 = vadd.f32 %v151, %v152
    %v154 = vrot.slane %v153, 1
    %v155 = vadd.f32 %v153, %v154
    %v156 = vsel %vm146, %v144, 0.0
    %v157 = vsel %vm146, %v145, 0.0
    %v158 = vadd.f32 %v156, %v157
    %v159 = vrot.slane %v158, 4
    %v160 = vadd.f32 %v158, %v159
    %v161 = vrot.slane %v160, 2
    %v162 = vadd.f32 %v160, %v161
    %v163 = vrot.slane %v162, 1
    %v164 = vadd.f32 %v162, %v163
    %v165 = vrcp.pop 16.0
    %v166 = vmul.f32 16.0, %v165
    %v167 = vsub.f32 1.0, %v166
    %v168 = vmul.f32 %v165, %v167
    %v169 = vadd.f32 %v165, %v168
    %vm170 = vweird.f32 %v165
    %v171 = vsel %vm170, %v165, %v169
    %v172 = vmul.f32 %v155, %v171
    %v173 = vmul.f32 %v164, %v171
    %v174 = vld [vmem:[#allocation2] sm:$0x1]
    %v176 = vperm.slane %v174, 0
    %v178 = vadd.f32 %v172, %v176
    %v179 = vadd.f32 %v173, %v176
    %v180 = vpack.c.bf16 %v178, %v178
    %v181 = vpack.c.bf16 %v179, %v179
    %v182 = vld [vmem:[#allocation5] sm:$0xff]
    %v183 = vld [vmem:[#allocation5 + $0x8] sm:$0xff]
    %v184 = vadd.f32 %v142, %v182
    %v185 = vadd.f32 %v143, %v183
    %v186 = vadd.f32 %v144, %v182
    %v187 = vadd.f32 %v145, %v183
    %v188 = vpack.c.bf16 %v184, %v184
    %v189 = vpack.c.bf16 %v185, %v185
    %v190 = vpack.c.bf16 %v186, %v186
    %v191 = vpack.c.bf16 %v187, %v187
    %v192 = vld [vmem:[#allocation7] sm:$0xf]
    %v193 = vld [vmem:[#allocation7 + $0x4] sm:$0xf]
    %v194 = vld [vmem:[#allocation7 + $0x8] sm:$0xf]
    %v195 = vld [vmem:[#allocation7 + $0xc] sm:$0xf]
    %v196 = vld [vmem:[%s4] sm:$0x1]
    %v198 = vperm.slane %v196, 0
    %v202 = vunpack.c.l.b16 %v180
    %v203 = vunpack.c.l.b16 %v181
    %v204 = vrot.slane %v203, 7
    %vm205 = vcmask 1041409
    %v206 = vsel %vm205, %v204, %v202
    %v207 = vpack.c.b16 %v206, %v206
    %v212 = vunpack.c.l.b16 %v192
    %v213 = vunpack.c.l.b16 %v193
    %v214 = vunpack.c.l.b16 %v194
    %v215 = vunpack.c.l.b16 %v195
    %v216 = vpack.c.b16 %v213, %v212
    %v217 = vpack.c.b16 %v215, %v214
    %v221 = vsel %vm146, %v207, 0
    %223 = vmatpush.bf16.msra.mxu0 0
    %224 = vmatpush.bf16.msra.mxu0 0
    %225 = vmatpush.bf16.msra.mxu0 0
    %226 = vmatpush.bf16.msra.mxu0 0
    %227 = vmatpush.bf16.msra.mxu0 0
    %228 = vmatpush.bf16.msra.mxu0 0
    %229 = vmatpush.bf16.msra.mxu0 %v217
    %230 = vmatpush.bf16.msra.mxu0 %v216
    %231 = vmatmul.bf16.gmra.mxu0 %v221
    %v232 = vpop.f32.mrf.mxu0
    %v233 = vadd.f32 %v198, %v232
    %v234 = vpop.f32.mrf.mxu0
    %235 = vdwg.mxu0
    %v236 = vld [vmem:[#allocation8] sm:$0xf]
    %v237 = vld [vmem:[#allocation8 + $0x4] sm:$0xf]
    %v238 = vld [vmem:[#allocation8 + $0x8] sm:$0xf]
    %v239 = vld [vmem:[#allocation8 + $0xc] sm:$0xf]
    %v240 = vld [vmem:[%s6] sm:$0x1]
    %v242 = vperm.slane %v240, 0
    %v248 = vunpack.c.l.b16 %v236
    %v249 = vunpack.c.l.b16 %v237
    %v250 = vunpack.c.l.b16 %v238
    %v251 = vunpack.c.l.b16 %v239
    %v252 = vpack.c.b16 %v249, %v248
    %v253 = vpack.c.b16 %v251, %v250
    %256 = vmatpush.bf16.msra.mxu0 0
    %257 = vmatpush.bf16.msra.mxu0 0
    %258 = vmatpush.bf16.msra.mxu0 0
    %259 = vmatpush.bf16.msra.mxu0 0
    %260 = vmatpush.bf16.msra.mxu0 0
    %261 = vmatpush.bf16.msra.mxu0 0
    %262 = vmatpush.bf16.msra.mxu0 %v253
    %263 = vmatpush.bf16.msra.mxu0 %v252
    %264 = vmatmul.bf16.gmra.mxu0 %v221
    %v265 = vpop.f32.mrf.mxu0
    %v266 = vadd.f32 %v242, %v265
    %v267 = vpop.f32.mrf.mxu0
    %268 = vdwg.mxu0
    %v269 = vld [vmem:[#allocation10] sm:$0xf]
    %v270 = vld [vmem:[#allocation10 + $0x4] sm:$0xf]
    %v271 = vld [vmem:[#allocation10 + $0x8] sm:$0xf]
    %v272 = vld [vmem:[#allocation10 + $0xc] sm:$0xf]
    %v273 = vld [vmem:[%s8] sm:$0x1]
    %v275 = vperm.slane %v273, 0
    %v281 = vunpack.c.l.b16 %v269
    %v282 = vunpack.c.l.b16 %v270
    %v283 = vunpack.c.l.b16 %v271
    %v284 = vunpack.c.l.b16 %v272
    %v285 = vpack.c.b16 %v282, %v281
    %v286 = vpack.c.b16 %v284, %v283
    %289 = vmatpush.bf16.msra.mxu0 0
    %290 = vmatpush.bf16.msra.mxu0 0
    %291 = vmatpush.bf16.msra.mxu0 0
    %292 = vmatpush.bf16.msra.mxu0 0
    %293 = vmatpush.bf16.msra.mxu0 0
    %294 = vmatpush.bf16.msra.mxu0 0
    %295 = vmatpush.bf16.msra.mxu0 %v286
    %296 = vmatpush.bf16.msra.mxu0 %v285
    %297 = vmatmul.bf16.gmra.mxu0 %v221
    %v298 = vpop.f32.mrf.mxu0
    %v299 = vadd.f32 %v275, %v298
    %v300 = vpop.f32.mrf.mxu0
    %301 = vdwg.mxu0
    %v306 = vunpack.c.l.b16 %v188
    %v307 = vunpack.c.l.b16 %v189
    %v308 = vunpack.c.l.b16 %v190
    %v309 = vunpack.c.l.b16 %v191
    %v310 = vpack.c.b16 %v307, %v306
    %v311 = vpack.c.b16 %v309, %v308
    %v313 = vsel %vm146, %v310, 0
    %v316 = vsel %vm146, %v311, 0
    %318 = vmatpush.bf16.msra.mxu0 0
    %319 = vmatpush.bf16.msra.mxu0 0
    %320 = vmatpush.bf16.msra.mxu0 0
    %321 = vmatpush.bf16.msra.mxu0 0
    %322 = vmatpush.bf16.msra.mxu0 0
    %323 = vmatpush.bf16.msra.mxu0 0
    %324 = vmatpush.bf16.msra.mxu0 %v253
    %325 = vmatpush.bf16.msra.mxu0 %v252
    %326 = vmatmul.bf16.gmra.mxu0 %v313
    %v327 = vpop.f32.mrf.mxu0
    %v328 = vadd.f32 %v242, %v327
    %v329 = vpop.f32.mrf.mxu0
    %v330 = vadd.f32 %v242, %v329
    %331 = vmatmul.bf16.gmra.mxu0 %v316
    %v332 = vpop.f32.mrf.mxu0
    %v333 = vadd.f32 %v242, %v332
    %v334 = vpop.f32.mrf.mxu0
    %v335 = vadd.f32 %v242, %v334
    %336 = vdwg.mxu0
    %v337 = vpack.c.bf16 %v328, %v328
    %v338 = vpack.c.bf16 %v330, %v330
    %v339 = vpack.c.bf16 %v333, %v333
    %v340 = vpack.c.bf16 %v335, %v335
    %341 = vmatpush.bf16.msra.mxu0 0
    %342 = vmatpush.bf16.msra.mxu0 0
    %343 = vmatpush.bf16.msra.mxu0 0
    %344 = vmatpush.bf16.msra.mxu0 0
    %345 = vmatpush.bf16.msra.mxu0 0
    %346 = vmatpush.bf16.msra.mxu0 0
    %347 = vmatpush.bf16.msra.mxu0 %v286
    %348 = vmatpush.bf16.msra.mxu0 %v285
    %349 = vmatmul.bf16.gmra.mxu0 %v313
    %v350 = vpop.f32.mrf.mxu0
    %v351 = vadd.f32 %v275, %v350
    %v352 = vpop.f32.mrf.mxu0
    %v353 = vadd.f32 %v275, %v352
    %354 = vmatmul.bf16.gmra.mxu0 %v316
    %v355 = vpop.f32.mrf.mxu0
    %v356 = vadd.f32 %v275, %v355
    %v357 = vpop.f32.mrf.mxu0
    %v358 = vadd.f32 %v275, %v357
    %359 = vdwg.mxu0
    %v360 = vpack.c.bf16 %v351, %v351
    %v361 = vpack.c.bf16 %v353, %v353
    %v362 = vpack.c.bf16 %v356, %v356
    %v363 = vpack.c.bf16 %v358, %v358
    %v364 = vld [vmem:[%s11] sm:$0xf]
    %v365 = vld [vmem:[%s11 + $0x4] sm:$0xf]
    %v366 = vld [vmem:[%s11 + $0x8] sm:$0xf]
    %v367 = vld [vmem:[%s11 + $0xc] sm:$0xf]
    %v368 = vld [vmem:[%s12] sm:$0x3]
    %v369 = vmul.f32 %v233, %v266
    %v370 = vpack.c.bf16 %v369, %v369
    %v375 = vunpack.c.l.b16 %v364
    %v376 = vunpack.c.l.b16 %v365
    %v377 = vunpack.c.l.b16 %v366
    %v378 = vunpack.c.l.b16 %v367
    %v379 = vpack.c.b16 %v376, %v375
    %v380 = vpack.c.b16 %v378, %v377
    %v384 = vsel %vm146, %v370, 0
    %386 = vmatpush.bf16.msra.mxu0 0
    %387 = vmatpush.bf16.msra.mxu0 0
    %388 = vmatpush.bf16.msra.mxu0 0
    %389 = vmatpush.bf16.msra.mxu0 0
    %390 = vmatpush.bf16.msra.mxu0 0
    %391 = vmatpush.bf16.msra.mxu0 0
    %392 = vmatpush.bf16.msra.mxu0 %v380
    %393 = vmatpush.bf16.msra.mxu0 %v379
    %394 = vmatmul.bf16.gmra.mxu0 %v384
    %v395 = vpop.f32.mrf.mxu0
    %v396 = vadd.f32 0.0, %v395
    %v397 = vpop.f32.mrf.mxu0
    %398 = vdwg.mxu0
    %v399 = vpack.c.bf16 %v233, %v233
    %v401 = vrot.slane %v399, 3
    %vm402 = vcmask 1040384
    %v405 = vsel %vm402, %v399, %v401
    %v407 = vunpack.i.l.s16 %v405
    %v408 = vunpack.i.h.s16 %v405
    %v409 = vpack.i.b16 %v407, %v407
    %v410 = vpack.i.b16 %v408, %v408
    %v411 = vperm.slane %v409, 0
    %v412 = vperm.slane %v410, 0
    %v414 = vpack.i.b16 %v411, %v411
    %v416 = vperm.slane %v414, 0
    %v418 = vpack.i.b16 %v412, %v412
    %v420 = vperm.slane %v418, 0
    %v421 = vunpack.c.l.bf16 %v337
    %v422 = vunpack.c.l.bf16 %v338
    %v423 = vunpack.c.l.bf16 %v339
    %v424 = vunpack.c.l.bf16 %v340
    %v425 = vunpack.c.l.bf16 %v416
    %v426 = vunpack.c.l.bf16 %v420
    %v427 = vmul.f32 %v421, %v425
    %v428 = vmul.f32 %v422, %v425
    %v429 = vmul.f32 %v423, %v426
    %v430 = vmul.f32 %v424, %v426
    %v431 = vpack.c.bf16 %v427, %v427
    %v432 = vpack.c.bf16 %v428, %v428
    %v433 = vpack.c.bf16 %v429, %v429
    %v434 = vpack.c.bf16 %v430, %v430
    %v439 = vunpack.c.l.b16 %v431
    %v440 = vunpack.c.l.b16 %v432
    %v441 = vunpack.c.l.b16 %v433
    %v442 = vunpack.c.l.b16 %v434
    %v443 = vpack.c.b16 %v440, %v439
    %v444 = vpack.c.b16 %v442, %v441
    %v446 = vsel %vm146, %v443, 0
    %v449 = vsel %vm146, %v444, 0
    %451 = vmatpush.bf16.msra.mxu0 0
    %452 = vmatpush.bf16.msra.mxu0 0
    %453 = vmatpush.bf16.msra.mxu0 0
    %454 = vmatpush.bf16.msra.mxu0 0
    %455 = vmatpush.bf16.msra.mxu0 0
    %456 = vmatpush.bf16.msra.mxu0 0
    %457 = vmatpush.bf16.msra.mxu0 %v380
    %458 = vmatpush.bf16.msra.mxu0 %v379
    %459 = vmatmul.bf16.gmra.mxu0 %v446
    %v460 = vpop.f32.mrf.mxu0
    %v461 = vadd.f32 0.0, %v460
    %v462 = vpop.f32.mrf.mxu0
    %v463 = vadd.f32 0.0, %v462
    %464 = vmatmul.bf16.gmra.mxu0 %v449
    %v465 = vpop.f32.mrf.mxu0
    %v466 = vadd.f32 0.0, %v465
    %v467 = vpop.f32.mrf.mxu0
    %v468 = vadd.f32 0.0, %v467
    %469 = vdwg.mxu0
    %vm470 = vcmask 31744
    %v471 = vsel %vm470, %v461, -inf
    %v472 = vsel %vm470, %v463, -inf
    %v473 = vmax.f32 %v471, %v472
    %v474 = vrot.slane %v473, 4
    %v475 = vmax.f32 %v473, %v474
    %v476 = vrot.slane %v475, 2
    %v477 = vmax.f32 %v475, %v476
    %v478 = vrot.slane %v477, 1
    %v479 = vmax.f32 %v477, %v478
    %v480 = vsel %vm470, %v466, -inf
    %v481 = vsel %vm470, %v468, -inf
    %v482 = vmax.f32 %v480, %v481
    %v483 = vrot.slane %v482, 4
    %v484 = vmax.f32 %v482, %v483
    %v485 = vrot.slane %v484, 2
    %v486 = vmax.f32 %v484, %v485
    %v487 = vrot.slane %v486, 1
    %v488 = vmax.f32 %v486, %v487
    %v490 = vrot.slane %v396, 1
    %v493 = vmax.f32 %v479, %v396
    %v494 = vmax.f32 %v488, %v490
    %v497 = vrot.slane %v494, 7
    %v498 = vsel %vm205, %v497, %v493
    %v500 = vsub.f32 %v396, %v498
    %v501 = vmul.f32 %v500, 1.442695
    %v502 = vpow.pop %v501
    %v503 = vperm.slane %v493, 0
    %v504 = vperm.slane %v494, 0
    %v505 = vsub.f32 %v461, %v503
    %v506 = vsub.f32 %v463, %v503
    %v507 = vsub.f32 %v466, %v504
    %v508 = vsub.f32 %v468, %v504
    %v509 = vmul.f32 %v505, 1.442695
    %v510 = vpow.pop %v509
    %v511 = vmul.f32 %v506, 1.442695
    %v512 = vpow.pop %v511
    %v513 = vmul.f32 %v507, 1.442695
    %v514 = vpow.pop %v513
    %v515 = vmul.f32 %v508, 1.442695
    %v516 = vpow.pop %v515
    %v517 = vsel %vm470, %v510, 0.0
    %v518 = vsel %vm470, %v512, 0.0
    %v519 = vadd.f32 %v517, %v518
    %v520 = vrot.slane %v519, 4
    %v521 = vadd.f32 %v519, %v520
    %v522 = vrot.slane %v521, 2
    %v523 = vadd.f32 %v521, %v522
    %v524 = vrot.slane %v523, 1
    %v525 = vadd.f32 %v523, %v524
    %v526 = vsel %vm470, %v514, 0.0
    %v527 = vsel %vm470, %v516, 0.0
    %v528 = vadd.f32 %v526, %v527
    %v529 = vrot.slane %v528, 4
    %v530 = vadd.f32 %v528, %v529
    %v531 = vrot.slane %v530, 2
    %v532 = vadd.f32 %v530, %v531
    %v533 = vrot.slane %v532, 1
    %v534 = vadd.f32 %v532, %v533
    %v537 = vsel %vm205, %v534, %v525
    %v539 = vadd.f32 %v502, %v537
    %v540 = vrcp.pop %v539
    %v541 = vmul.f32 %v539, %v540
    %v542 = vsub.f32 1.0, %v541
    %v543 = vmul.f32 %v540, %v542
    %v544 = vadd.f32 %v540, %v543
    %vm545 = vweird.f32 %v539
    %vm546 = vweird.f32 %v540
    %vm547 = vmor %vm545, %vm546
    %v548 = vsel %vm547, %v540, %v544
    %v549 = vand.u32 2147483647, %v539
    %vm550 = vcmp.eq.f32.partialorder %v549, 8.507059e+37
    %v551 = vand.u32 %v539, 2147483648
    %v552 = vor.u32 1.1754944e-38, %v551
    %v553 = vsel %vm550, %v552, %v548
    %v554 = vmul.f32 1.0, %v553
    %v555 = vmul.f32 %v502, %v554
    %v557 = vrot.slane %v554, 1
    %v558 = vperm.slane %v554, 0
    %v559 = vperm.slane %v557, 0
    %v562 = vmul.f32 %v510, %v558
    %v563 = vmul.f32 %v512, %v558
    %v564 = vmul.f32 %v514, %v559
    %v565 = vmul.f32 %v516, %v559
    %v566 = vpack.c.bf16 %v562, %v562
    %v567 = vpack.c.bf16 %v563, %v563
    %v568 = vpack.c.bf16 %v564, %v564
    %v569 = vpack.c.bf16 %v565, %v565
    %v574 = vunpack.c.l.b16 %v566
    %v575 = vunpack.c.l.b16 %v567
    %v576 = vunpack.c.l.b16 %v568
    %v577 = vunpack.c.l.b16 %v569
    %v578 = vpack.c.b16 %v575, %v574
    %v579 = vpack.c.b16 %v577, %v576
    %v581 = vsel %vm470, %v578, 0
    %v584 = vsel %vm470, %v579, 0
    %vm586 = vcmask 1041408
    %v588 = vsel %vm586, %v368, 0
    %590 = vmatpush.bf16.msra.mxu0 0
    %591 = vmatpush.bf16.msra.mxu0 0
    %592 = vmatpush.bf16.msra.mxu0 0
    %593 = vmatpush.bf16.msra.mxu0 0
    %594 = vmatpush.bf16.msra.mxu0 0
    %595 = vmatpush.bf16.msra.mxu0 0
    %596 = vmatpush.bf16.msra.mxu0 0
    %597 = vmatpush.bf16.msra.mxu0 %v588
    %598 = vmatmul.bf16.gmra.mxu0 %v581
    %v599 = vpop.f32.mrf.mxu0
    %v600 = vadd.f32 0.0, %v599
    %v601 = vpop.f32.mrf.mxu0
    %v602 = vadd.f32 0.0, %v601
    %603 = vmatmul.bf16.gmra.mxu0 %v584
    %v604 = vpop.f32.mrf.mxu0
    %v605 = vadd.f32 0.0, %v604
    %v606 = vpop.f32.mrf.mxu0
    %v607 = vadd.f32 0.0, %v606
    %608 = vdwg.mxu0
    %v609 = vpack.c.bf16 %v600, %v600
    %v610 = vpack.c.bf16 %v602, %v602
    %v611 = vpack.c.bf16 %v605, %v605
    %v612 = vpack.c.bf16 %v607, %v607
    %v613 = vunpack.c.l.bf16 %v609
    %v614 = vunpack.c.l.bf16 %v610
    %v615 = vunpack.c.l.bf16 %v611
    %v616 = vunpack.c.l.bf16 %v612
    %v617 = vunpack.c.l.bf16 %v360
    %v618 = vunpack.c.l.bf16 %v361
    %v619 = vunpack.c.l.bf16 %v362
    %v620 = vunpack.c.l.bf16 %v363
    %v621 = vmul.f32 %v613, %v617
    %v622 = vmul.f32 %v614, %v618
    %v623 = vmul.f32 %v615, %v619
    %v624 = vmul.f32 %v616, %v620
    %v625 = vpack.c.bf16 %v621, %v621
    %v626 = vpack.c.bf16 %v622, %v622
    %v627 = vpack.c.bf16 %v623, %v623
    %v628 = vpack.c.bf16 %v624, %v624
    %v629 = vunpack.c.l.bf16 %v625
    %v630 = vunpack.c.l.bf16 %v626
    %v631 = vunpack.c.l.bf16 %v627
    %v632 = vunpack.c.l.bf16 %v628
    %v633 = vsel %vm146, %v629, 0.0
    %v634 = vsel %vm146, %v630, 0.0
    %v635 = vadd.f32 %v633, %v634
    %v636 = vrot.slane %v635, 4
    %v637 = vadd.f32 %v635, %v636
    %v638 = vrot.slane %v637, 2
    %v639 = vadd.f32 %v637, %v638
    %v640 = vrot.slane %v639, 1
    %v641 = vadd.f32 %v639, %v640
    %v642 = vsel %vm146, %v631, 0.0
    %v643 = vsel %vm146, %v632, 0.0
    %v644 = vadd.f32 %v642, %v643
    %v645 = vrot.slane %v644, 4
    %v646 = vadd.f32 %v644, %v645
    %v647 = vrot.slane %v646, 2
    %v648 = vadd.f32 %v646, %v647
    %v649 = vrot.slane %v648, 1
    %v650 = vadd.f32 %v648, %v649
    %v651 = vpack.c.bf16 %v555, %v555
    %v653 = vsel %vm470, %v651, 0
    %655 = vmatpush.bf16.msra.mxu0 0
    %656 = vmatpush.bf16.msra.mxu0 0
    %657 = vmatpush.bf16.msra.mxu0 0
    %658 = vmatpush.bf16.msra.mxu0 0
    %659 = vmatpush.bf16.msra.mxu0 0
    %660 = vmatpush.bf16.msra.mxu0 0
    %661 = vmatpush.bf16.msra.mxu0 0
    %662 = vmatpush.bf16.msra.mxu0 %v588
    %663 = vmatmul.bf16.gmra.mxu0 %v653
    %v664 = vpop.f32.mrf.mxu0
    %v665 = vadd.f32 0.0, %v664
    %v666 = vpop.f32.mrf.mxu0
    %667 = vdwg.mxu0
    %v668 = vmul.f32 %v665, %v299
    %v670 = vrot.slane %v668, 1
    %v673 = vadd.f32 %v641, %v668
    %v674 = vadd.f32 %v650, %v670
    %v675 = vpack.c.bf16 %v673, %v673
    %v676 = vpack.c.bf16 %v674, %v674
    %v677 = vld [vmem:[#allocation11] sm:$0xf]
    %v678 = vld [vmem:[#allocation11 + $0x4] sm:$0xf]
    %v679 = vld [vmem:[#allocation11 + $0x8] sm:$0xf]
    %v680 = vld [vmem:[#allocation11 + $0xc] sm:$0xf]
    %v681 = vld [vmem:[%s10] sm:$0x1]
    %v683 = vperm.slane %v681, 0
    %v687 = vunpack.c.l.b16 %v675
    %v688 = vunpack.c.l.b16 %v676
    %v689 = vrot.slane %v688, 7
    %v690 = vsel %vm205, %v689, %v687
    %v691 = vpack.c.b16 %v690, %v690
    %v696 = vunpack.c.l.b16 %v677
    %v697 = vunpack.c.l.b16 %v678
    %v698 = vunpack.c.l.b16 %v679
    %v699 = vunpack.c.l.b16 %v680
    %v700 = vpack.c.b16 %v697, %v696
    %v701 = vpack.c.b16 %v699, %v698
    %v705 = vsel %vm146, %v691, 0
    %707 = vmatpush.bf16.msra.mxu0 0
    %708 = vmatpush.bf16.msra.mxu0 0
    %709 = vmatpush.bf16.msra.mxu0 0
    %710 = vmatpush.bf16.msra.mxu0 0
    %711 = vmatpush.bf16.msra.mxu0 0
    %712 = vmatpush.bf16.msra.mxu0 0
    %713 = vmatpush.bf16.msra.mxu0 %v701
    %714 = vmatpush.bf16.msra.mxu0 %v700
    %715 = vmatmul.bf16.gmra.mxu0 %v705
    %v716 = vpop.f32.mrf.mxu0
    %v717 = vadd.f32 %v683, %v716
    %v718 = vpop.f32.mrf.mxu0
    %719 = vdwg.mxu0
    %720 = vst [vmem:[#allocation13] sm:$0x3] %v717
    // Predicated region
    $region78: #{tpu_custom_call.1} parent=1 // pred_check
      _
    $region79: #{tpu_custom_call.1} parent=1 // pred_check_branch
      %722 = sbr.rel (0) target = $region81
    $region80: #{tpu_custom_call.1} parent=1 // pred_region
      %724 = vsyncadd [#allocation4], 0
      %s726 = sshll.u32 [#allocation13], 4
      %s727 = int_to_ptr.vmem [resolvable:$true] %s726
      %s728 = sshll.u32 %s13, 4
      %s729 = int_to_ptr.hbm [resolvable:$true] %s728
      %731 = dma.vmem_to_hbm [thread:$0]  %s727, 32, %s729, [#allocation4]
    $region81: #{tpu_custom_call.1} parent=1 // pred_fallthru
      _
    // Predicated region
    $region82: #{tpu_custom_call.1} parent=1 // pred_check
      _
    $region83: #{tpu_custom_call.1} parent=1 // pred_check_branch
      %733 = sbr.rel (0) target = $region85
    $region84: #{tpu_custom_call.1} parent=1 // pred_region
      %735 = dma.done [#allocation4], 32
    $region85: #{tpu_custom_call.1} parent=1 // pred_fallthru
      _
    %736 = vsyncpa [#allocation3], 1
    %737 = vsyncpa [#allocation6], 1
    %738 = vsyncpa [#allocation9], 1
    %739 = vsyncpa [#allocation12], 1
    %740 = vsyncpa [#allocation4], 1

</llo_original>
